<compile_context>
chip_gen: v6e
topology: v6e:2x2x1
jax: 0.10.0
libtpu: 0.0.40
codegen_flags: <defaults>
</compile_context>

<pallas_src>
import functools

import jax
import jax.numpy as jnp
from jax import lax
from jax.experimental import pallas as pl
from jax.experimental.pallas import tpu as pltpu


def _mlp_self_kernel(n1, n2, x_ref, *refs):
    """Both MLP heads of MLP_self.forward in one straight-line kernel body.

    refs = (w1_0, b1_0, ..., w1_{n1-1}, b1_{n1-1},
            w2_0, b2_0, ..., w2_{n2-1}, b2_{n2-1},
            out1_ref, out2_ref)

    All operands are full-array VMEM blocks (no grid, no pipelining).  The two layer
    chains share no data except x, so the scheduler is free to interleave them.
    """
    out1_ref, out2_ref = refs[-2], refs[-1]
    wb = refs[:-2]

    def chain(offset, n_layers):
        y = x_ref[...].astype(jnp.float32)          # (batch, num_i)
        for l in range(n_layers):
            w = wb[offset + 2 * l][...]             # (d_in, d_out), f32 or bf16
            b = wb[offset + 2 * l + 1][...]         # (1, d_out), f32
            # Cast the activation to the weight dtype (bf16 path hits the bf16-native
            # MXU on every generation); accumulation is always f32.
            y = jnp.dot(y.astype(w.dtype), w,
                        preferred_element_type=jnp.float32) + b
            if l < n_layers - 1:
                y = jnp.maximum(y, 0.0)             # ReLU, f32 VPU (v5e-safe)
        return y                                    # (batch, d_out), f32

    y1 = chain(0, n1)                               # (batch, num_o)
    y2 = chain(2 * n1, n2)                          # (batch, num_i)

    # mean(dim=0) as an MXU matmul (keeps the cross-sublane reduce off the XLU) and
    # written as a single (1, num_o) row -- no broadcast slab, no wrapper slice.
    batch = y1.shape[0]
    mean_w = jnp.full((1, batch), 1.0 / batch, jnp.float32)
    out1_ref[...] = jnp.dot(mean_w, y1, preferred_element_type=jnp.float32)
    out2_ref[...] = y2.astype(out2_ref.dtype)


def _full_block(a):
    nd = a.ndim
    return pl.BlockSpec(a.shape, lambda *_: (0,) * nd)


def prepare_kernel_params(head1, head2, *, weights_dtype=jnp.float32):
    """Flatten per-head (weights, biases) into the kernel argument list."""
    (w1, b1), (w2, b2) = head1, head2

    def flat(ws, bs):
        args = []
        for w, b in zip(ws, bs):
            args.append(w.astype(weights_dtype))
            args.append(b.reshape(1, -1).astype(jnp.float32))
        return args

    meta = dict(n1=len(w1), n2=len(w2),
                num_o=w1[-1].shape[1], num_i2=w2[-1].shape[1])
    return flat(w1, b1) + flat(w2, b2), meta


def mlp_self_forward(x, flat_args, meta):
    """MLP_self.forward as a single grid-less pallas_call.  Returns (out1, out2)."""
    n1, n2 = meta["n1"], meta["n2"]
    num_o, num_i2 = meta["num_o"], meta["num_i2"]
    batch, _ = x.shape

    args = [x.astype(jnp.float32)] + list(flat_args)

    # Everything (single-buffered) must fit in VMEM; guard + clamp the request so a
    # v7x build (64 MiB physical) always keeps headroom for compiler scratch.
    resident = sum(a.size * a.dtype.itemsize for a in args)
    resident += (num_o + batch * num_i2) * 4
    if resident > 40 * 1024 * 1024:
        # TODO(synk): switch to the tiled-fallback path described in the header.
        raise NotImplementedError("MLP too large for fully VMEM-resident kernel")
    vmem_limit = min(max(resident + (4 << 20), 16 << 20), 48 << 20)

    kernel = functools.partial(_mlp_self_kernel, n1, n2)
    out1, out2 = pl.pallas_call(
        kernel,
        out_shape=(jax.ShapeDtypeStruct((1, num_o), jnp.float32),
                   jax.ShapeDtypeStruct((batch, num_i2), jnp.float32)),
        in_specs=[_full_block(a) for a in args],
        out_specs=(pl.BlockSpec((1, num_o), lambda *_: (0, 0)),
                   pl.BlockSpec((batch, num_i2), lambda *_: (0, 0))),
        compiler_params=pltpu.CompilerParams(vmem_limit_bytes=vmem_limit),
    )(*args)

    return out1[0], out2                       # (num_o,), (batch, num_i)


def init_linear(key, in_dim, out_dim):
    """Deterministic synthetic init (Kaiming-uniform-like scale)."""
    kw, kb = jax.random.split(key)
    scale = 1.0 / jnp.sqrt(jnp.float32(in_dim))
    w = jax.random.uniform(kw, (in_dim, out_dim), jnp.float32, -scale, scale)
    b = jax.random.uniform(kb, (out_dim,), jnp.float32, -scale, scale)
    return w, b


def build_params(key, num_i, num_h, num_o):
    dims1 = [num_i, num_h, 2 * num_h, 4 * num_h, 2 * num_h, num_h, num_o]
    dims2 = [num_i, num_h, 2 * num_h, 4 * num_h, 8 * num_h,
             4 * num_h, 2 * num_h, num_h, num_i]
    keys = jax.random.split(key, (len(dims1) - 1) + (len(dims2) - 1))
    k_iter = iter(keys)
    w1, b1, w2, b2 = [], [], [], []
    for i in range(len(dims1) - 1):
        w, b = init_linear(next(k_iter), dims1[i], dims1[i + 1])
        w1.append(w); b1.append(b)
    for i in range(len(dims2) - 1):
        w, b = init_linear(next(k_iter), dims2[i], dims2[i + 1])
        w2.append(w); b2.append(b)
    return (w1, b1), (w2, b2)


def reference_forward(x, head1, head2):
    hi = lax.Precision.HIGHEST

    def head(x, ws, bs):
        y = x
        for i, (w, b) in enumerate(zip(ws, bs)):
            y = jnp.dot(y, w, precision=hi) + b
            if i < len(ws) - 1:
                y = jnp.maximum(y, 0.0)
        return y

    (w1, b1), (w2, b2) = head1, head2
    return head(x, w1, b1).mean(axis=0), head(x, w2, b2)


if __name__ == "__main__":
    # Small shapes consistent with the module's forward: input (batch, num_i).
    batch, num_i, num_h, num_o = 8, 32, 32, 16
    num_heads = 4   # unused in forward (kept for parity with __init__ signature)

    key = jax.random.PRNGKey(0)
    k_params, k_x = jax.random.split(key)
    head1, head2 = build_params(k_params, num_i, num_h, num_o)
    x = jax.random.normal(k_x, (batch, num_i), jnp.float32)

    ref1, ref2 = reference_forward(x, head1, head2)

    # --- f32 weight path (exact; works on v5e / v6e / v7x) ---
    flat_f32, meta = prepare_kernel_params(head1, head2, weights_dtype=jnp.float32)
    fwd_f32 = jax.jit(lambda xx, fa: mlp_self_forward(xx, fa, meta))
    out1, out2 = fwd_f32(x, flat_f32)
    out1 = jax.block_until_ready(out1)
    out2 = jax.block_until_ready(out2)

    assert out1.shape == (num_o,)
    assert out2.shape == (batch, num_i)
    assert jnp.allclose(out1, ref1, atol=1e-4, rtol=1e-4)
    assert jnp.allclose(out2, ref2, atol=1e-4, rtol=1e-4)

    # --- bf16 weight path (bf16-native MXU on all generations, f32 accumulation) ---
    # Outputs lose ~2-3 decimal digits vs the f32 path, hence the loose tolerance.
    flat_bf16, meta_bf = prepare_kernel_params(head1, head2,
                                               weights_dtype=jnp.bfloat16)
    fwd_bf16 = jax.jit(lambda xx, fa: mlp_self_forward(xx, fa, meta_bf))
    o1b, o2b = fwd_bf16(x, flat_bf16)
    o1b = jax.block_until_ready(o1b)
    o2b = jax.block_until_ready(o2b)
    assert jnp.allclose(o1b, ref1, atol=1e-1, rtol=1e-1)
    assert jnp.allclose(o2b, ref2, atol=1e-1, rtol=1e-1)

    print("KERNEL_OK")
</pallas_src>

<mosaic_0001>
module attributes {stable_mosaic.version = 11 : i64} {
  func.func @_mlp_self_kernel(%arg0: memref<8x32xf32, #tpu.memory_space<vmem>>, %arg1: memref<32x32xf32, #tpu.memory_space<vmem>>, %arg2: memref<1x32xf32, #tpu.memory_space<vmem>>, %arg3: memref<32x64xf32, #tpu.memory_space<vmem>>, %arg4: memref<1x64xf32, #tpu.memory_space<vmem>>, %arg5: memref<64x128xf32, #tpu.memory_space<vmem>>, %arg6: memref<1x128xf32, #tpu.memory_space<vmem>>, %arg7: memref<128x64xf32, #tpu.memory_space<vmem>>, %arg8: memref<1x64xf32, #tpu.memory_space<vmem>>, %arg9: memref<64x32xf32, #tpu.memory_space<vmem>>, %arg10: memref<1x32xf32, #tpu.memory_space<vmem>>, %arg11: memref<32x16xf32, #tpu.memory_space<vmem>>, %arg12: memref<1x16xf32, #tpu.memory_space<vmem>>, %arg13: memref<32x32xf32, #tpu.memory_space<vmem>>, %arg14: memref<1x32xf32, #tpu.memory_space<vmem>>, %arg15: memref<32x64xf32, #tpu.memory_space<vmem>>, %arg16: memref<1x64xf32, #tpu.memory_space<vmem>>, %arg17: memref<64x128xf32, #tpu.memory_space<vmem>>, %arg18: memref<1x128xf32, #tpu.memory_space<vmem>>, %arg19: memref<128x256xf32, #tpu.memory_space<vmem>>, %arg20: memref<1x256xf32, #tpu.memory_space<vmem>>, %arg21: memref<256x128xf32, #tpu.memory_space<vmem>>, %arg22: memref<1x128xf32, #tpu.memory_space<vmem>>, %arg23: memref<128x64xf32, #tpu.memory_space<vmem>>, %arg24: memref<1x64xf32, #tpu.memory_space<vmem>>, %arg25: memref<64x32xf32, #tpu.memory_space<vmem>>, %arg26: memref<1x32xf32, #tpu.memory_space<vmem>>, %arg27: memref<32x32xf32, #tpu.memory_space<vmem>>, %arg28: memref<1x32xf32, #tpu.memory_space<vmem>>, %arg29: memref<1x16xf32, #tpu.memory_space<vmem>>, %arg30: memref<8x32xf32, #tpu.memory_space<vmem>>) attributes {dimension_semantics = [], scalar_prefetch = 0 : i64, scratch_operands = 0 : i64, tpu.core_type = #tpu.core_type<tc>} {
    %c0 = arith.constant 0 : index
    %c0_0 = arith.constant 0 : index
    %0 = vector.load %arg0[%c0, %c0_0] : memref<8x32xf32, #tpu.memory_space<vmem>>, vector<8x32xf32>
    %c0_1 = arith.constant 0 : index
    %c0_2 = arith.constant 0 : index
    %1 = vector.load %arg1[%c0_1, %c0_2] : memref<32x32xf32, #tpu.memory_space<vmem>>, vector<32x32xf32>
    %c0_3 = arith.constant 0 : index
    %c0_4 = arith.constant 0 : index
    %2 = vector.load %arg2[%c0_3, %c0_4] : memref<1x32xf32, #tpu.memory_space<vmem>>, vector<1x32xf32>
    %cst = arith.constant dense<0.000000e+00> : vector<8x32xf32>
    %3 = tpu.matmul %0, %1, %cst {dimension_numbers = #tpu.dot_dimension_numbers<[1], [0], [0], [1], [0, 0, 1, 1], [], []>} : vector<8x32xf32>, vector<32x32xf32>, vector<8x32xf32> -> vector<8x32xf32>
    %4 = vector.broadcast %2 : vector<1x32xf32> to vector<8x32xf32>
    %5 = arith.addf %3, %4 : vector<8x32xf32>
    %cst_5 = arith.constant 0.000000e+00 : f32
    %6 = vector.broadcast %cst_5 : f32 to vector<8x32xf32>
    %7 = arith.maximumf %5, %6 : vector<8x32xf32>
    %c0_6 = arith.constant 0 : index
    %c0_7 = arith.constant 0 : index
    %8 = vector.load %arg3[%c0_6, %c0_7] : memref<32x64xf32, #tpu.memory_space<vmem>>, vector<32x64xf32>
    %c0_8 = arith.constant 0 : index
    %c0_9 = arith.constant 0 : index
    %9 = vector.load %arg4[%c0_8, %c0_9] : memref<1x64xf32, #tpu.memory_space<vmem>>, vector<1x64xf32>
    %cst_10 = arith.constant dense<0.000000e+00> : vector<8x64xf32>
    %10 = tpu.matmul %7, %8, %cst_10 {dimension_numbers = #tpu.dot_dimension_numbers<[1], [0], [0], [1], [0, 0, 1, 1], [], []>} : vector<8x32xf32>, vector<32x64xf32>, vector<8x64xf32> -> vector<8x64xf32>
    %11 = vector.broadcast %9 : vector<1x64xf32> to vector<8x64xf32>
    %12 = arith.addf %10, %11 : vector<8x64xf32>
    %cst_11 = arith.constant 0.000000e+00 : f32
    %13 = vector.broadcast %cst_11 : f32 to vector<8x64xf32>
    %14 = arith.maximumf %12, %13 : vector<8x64xf32>
    %c0_12 = arith.constant 0 : index
    %c0_13 = arith.constant 0 : index
    %15 = vector.load %arg5[%c0_12, %c0_13] : memref<64x128xf32, #tpu.memory_space<vmem>>, vector<64x128xf32>
    %c0_14 = arith.constant 0 : index
    %c0_15 = arith.constant 0 : index
    %16 = vector.load %arg6[%c0_14, %c0_15] : memref<1x128xf32, #tpu.memory_space<vmem>>, vector<1x128xf32>
    %cst_16 = arith.constant dense<0.000000e+00> : vector<8x128xf32>
    %17 = tpu.matmul %14, %15, %cst_16 {dimension_numbers = #tpu.dot_dimension_numbers<[1], [0], [0], [1], [0, 0, 1, 1], [], []>} : vector<8x64xf32>, vector<64x128xf32>, vector<8x128xf32> -> vector<8x128xf32>
    %18 = vector.broadcast %16 : vector<1x128xf32> to vector<8x128xf32>
    %19 = arith.addf %17, %18 : vector<8x128xf32>
    %cst_17 = arith.constant 0.000000e+00 : f32
    %20 = vector.broadcast %cst_17 : f32 to vector<8x128xf32>
    %21 = arith.maximumf %19, %20 : vector<8x128xf32>
    %c0_18 = arith.constant 0 : index
    %c0_19 = arith.constant 0 : index
    %22 = vector.load %arg7[%c0_18, %c0_19] : memref<128x64xf32, #tpu.memory_space<vmem>>, vector<128x64xf32>
    %c0_20 = arith.constant 0 : index
    %c0_21 = arith.constant 0 : index
    %23 = vector.load %arg8[%c0_20, %c0_21] : memref<1x64xf32, #tpu.memory_space<vmem>>, vector<1x64xf32>
    %cst_22 = arith.constant dense<0.000000e+00> : vector<8x64xf32>
    %24 = tpu.matmul %21, %22, %cst_22 {dimension_numbers = #tpu.dot_dimension_numbers<[1], [0], [0], [1], [0, 0, 1, 1], [], []>} : vector<8x128xf32>, vector<128x64xf32>, vector<8x64xf32> -> vector<8x64xf32>
    %25 = vector.broadcast %23 : vector<1x64xf32> to vector<8x64xf32>
    %26 = arith.addf %24, %25 : vector<8x64xf32>
    %cst_23 = arith.constant 0.000000e+00 : f32
    %27 = vector.broadcast %cst_23 : f32 to vector<8x64xf32>
    %28 = arith.maximumf %26, %27 : vector<8x64xf32>
    %c0_24 = arith.constant 0 : index
    %c0_25 = arith.constant 0 : index
    %29 = vector.load %arg9[%c0_24, %c0_25] : memref<64x32xf32, #tpu.memory_space<vmem>>, vector<64x32xf32>
    %c0_26 = arith.constant 0 : index
    %c0_27 = arith.constant 0 : index
    %30 = vector.load %arg10[%c0_26, %c0_27] : memref<1x32xf32, #tpu.memory_space<vmem>>, vector<1x32xf32>
    %cst_28 = arith.constant dense<0.000000e+00> : vector<8x32xf32>
    %31 = tpu.matmul %28, %29, %cst_28 {dimension_numbers = #tpu.dot_dimension_numbers<[1], [0], [0], [1], [0, 0, 1, 1], [], []>} : vector<8x64xf32>, vector<64x32xf32>, vector<8x32xf32> -> vector<8x32xf32>
    %32 = vector.broadcast %30 : vector<1x32xf32> to vector<8x32xf32>
    %33 = arith.addf %31, %32 : vector<8x32xf32>
    %cst_29 = arith.constant 0.000000e+00 : f32
    %34 = vector.broadcast %cst_29 : f32 to vector<8x32xf32>
    %35 = arith.maximumf %33, %34 : vector<8x32xf32>
    %c0_30 = arith.constant 0 : index
    %c0_31 = arith.constant 0 : index
    %36 = vector.load %arg11[%c0_30, %c0_31] : memref<32x16xf32, #tpu.memory_space<vmem>>, vector<32x16xf32>
    %c0_32 = arith.constant 0 : index
    %c0_33 = arith.constant 0 : index
    %37 = vector.load %arg12[%c0_32, %c0_33] : memref<1x16xf32, #tpu.memory_space<vmem>>, vector<1x16xf32>
    %cst_34 = arith.constant dense<0.000000e+00> : vector<8x16xf32>
    %38 = tpu.matmul %35, %36, %cst_34 {dimension_numbers = #tpu.dot_dimension_numbers<[1], [0], [0], [1], [0, 0, 1, 1], [], []>} : vector<8x32xf32>, vector<32x16xf32>, vector<8x16xf32> -> vector<8x16xf32>
    %39 = vector.broadcast %37 : vector<1x16xf32> to vector<8x16xf32>
    %40 = arith.addf %38, %39 : vector<8x16xf32>
    %c0_35 = arith.constant 0 : index
    %c0_36 = arith.constant 0 : index
    %41 = vector.load %arg0[%c0_35, %c0_36] : memref<8x32xf32, #tpu.memory_space<vmem>>, vector<8x32xf32>
    %c0_37 = arith.constant 0 : index
    %c0_38 = arith.constant 0 : index
    %42 = vector.load %arg13[%c0_37, %c0_38] : memref<32x32xf32, #tpu.memory_space<vmem>>, vector<32x32xf32>
    %c0_39 = arith.constant 0 : index
    %c0_40 = arith.constant 0 : index
    %43 = vector.load %arg14[%c0_39, %c0_40] : memref<1x32xf32, #tpu.memory_space<vmem>>, vector<1x32xf32>
    %cst_41 = arith.constant dense<0.000000e+00> : vector<8x32xf32>
    %44 = tpu.matmul %41, %42, %cst_41 {dimension_numbers = #tpu.dot_dimension_numbers<[1], [0], [0], [1], [0, 0, 1, 1], [], []>} : vector<8x32xf32>, vector<32x32xf32>, vector<8x32xf32> -> vector<8x32xf32>
    %45 = vector.broadcast %43 : vector<1x32xf32> to vector<8x32xf32>
    %46 = arith.addf %44, %45 : vector<8x32xf32>
    %cst_42 = arith.constant 0.000000e+00 : f32
    %47 = vector.broadcast %cst_42 : f32 to vector<8x32xf32>
    %48 = arith.maximumf %46, %47 : vector<8x32xf32>
    %c0_43 = arith.constant 0 : index
    %c0_44 = arith.constant 0 : index
    %49 = vector.load %arg15[%c0_43, %c0_44] : memref<32x64xf32, #tpu.memory_space<vmem>>, vector<32x64xf32>
    %c0_45 = arith.constant 0 : index
    %c0_46 = arith.constant 0 : index
    %50 = vector.load %arg16[%c0_45, %c0_46] : memref<1x64xf32, #tpu.memory_space<vmem>>, vector<1x64xf32>
    %cst_47 = arith.constant dense<0.000000e+00> : vector<8x64xf32>
    %51 = tpu.matmul %48, %49, %cst_47 {dimension_numbers = #tpu.dot_dimension_numbers<[1], [0], [0], [1], [0, 0, 1, 1], [], []>} : vector<8x32xf32>, vector<32x64xf32>, vector<8x64xf32> -> vector<8x64xf32>
    %52 = vector.broadcast %50 : vector<1x64xf32> to vector<8x64xf32>
    %53 = arith.addf %51, %52 : vector<8x64xf32>
    %cst_48 = arith.constant 0.000000e+00 : f32
    %54 = vector.broadcast %cst_48 : f32 to vector<8x64xf32>
    %55 = arith.maximumf %53, %54 : vector<8x64xf32>
    %c0_49 = arith.constant 0 : index
    %c0_50 = arith.constant 0 : index
    %56 = vector.load %arg17[%c0_49, %c0_50] : memref<64x128xf32, #tpu.memory_space<vmem>>, vector<64x128xf32>
    %c0_51 = arith.constant 0 : index
    %c0_52 = arith.constant 0 : index
    %57 = vector.load %arg18[%c0_51, %c0_52] : memref<1x128xf32, #tpu.memory_space<vmem>>, vector<1x128xf32>
    %cst_53 = arith.constant dense<0.000000e+00> : vector<8x128xf32>
    %58 = tpu.matmul %55, %56, %cst_53 {dimension_numbers = #tpu.dot_dimension_numbers<[1], [0], [0], [1], [0, 0, 1, 1], [], []>} : vector<8x64xf32>, vector<64x128xf32>, vector<8x128xf32> -> vector<8x128xf32>
    %59 = vector.broadcast %57 : vector<1x128xf32> to vector<8x128xf32>
    %60 = arith.addf %58, %59 : vector<8x128xf32>
    %cst_54 = arith.constant 0.000000e+00 : f32
    %61 = vector.broadcast %cst_54 : f32 to vector<8x128xf32>
    %62 = arith.maximumf %60, %61 : vector<8x128xf32>
    %c0_55 = arith.constant 0 : index
    %c0_56 = arith.constant 0 : index
    %63 = vector.load %arg19[%c0_55, %c0_56] : memref<128x256xf32, #tpu.memory_space<vmem>>, vector<128x256xf32>
    %c0_57 = arith.constant 0 : index
    %c0_58 = arith.constant 0 : index
    %64 = vector.load %arg20[%c0_57, %c0_58] : memref<1x256xf32, #tpu.memory_space<vmem>>, vector<1x256xf32>
    %cst_59 = arith.constant dense<0.000000e+00> : vector<8x256xf32>
    %65 = tpu.matmul %62, %63, %cst_59 {dimension_numbers = #tpu.dot_dimension_numbers<[1], [0], [0], [1], [0, 0, 1, 1], [], []>} : vector<8x128xf32>, vector<128x256xf32>, vector<8x256xf32> -> vector<8x256xf32>
    %66 = vector.broadcast %64 : vector<1x256xf32> to vector<8x256xf32>
    %67 = arith.addf %65, %66 : vector<8x256xf32>
    %cst_60 = arith.constant 0.000000e+00 : f32
    %68 = vector.broadcast %cst_60 : f32 to vector<8x256xf32>
    %69 = arith.maximumf %67, %68 : vector<8x256xf32>
    %c0_61 = arith.constant 0 : index
    %c0_62 = arith.constant 0 : index
    %70 = vector.load %arg21[%c0_61, %c0_62] : memref<256x128xf32, #tpu.memory_space<vmem>>, vector<256x128xf32>
    %c0_63 = arith.constant 0 : index
    %c0_64 = arith.constant 0 : index
    %71 = vector.load %arg22[%c0_63, %c0_64] : memref<1x128xf32, #tpu.memory_space<vmem>>, vector<1x128xf32>
    %cst_65 = arith.constant dense<0.000000e+00> : vector<8x128xf32>
    %72 = tpu.matmul %69, %70, %cst_65 {dimension_numbers = #tpu.dot_dimension_numbers<[1], [0], [0], [1], [0, 0, 1, 1], [], []>} : vector<8x256xf32>, vector<256x128xf32>, vector<8x128xf32> -> vector<8x128xf32>
    %73 = vector.broadcast %71 : vector<1x128xf32> to vector<8x128xf32>
    %74 = arith.addf %72, %73 : vector<8x128xf32>
    %cst_66 = arith.constant 0.000000e+00 : f32
    %75 = vector.broadcast %cst_66 : f32 to vector<8x128xf32>
    %76 = arith.maximumf %74, %75 : vector<8x128xf32>
    %c0_67 = arith.constant 0 : index
    %c0_68 = arith.constant 0 : index
    %77 = vector.load %arg23[%c0_67, %c0_68] : memref<128x64xf32, #tpu.memory_space<vmem>>, vector<128x64xf32>
    %c0_69 = arith.constant 0 : index
    %c0_70 = arith.constant 0 : index
    %78 = vector.load %arg24[%c0_69, %c0_70] : memref<1x64xf32, #tpu.memory_space<vmem>>, vector<1x64xf32>
    %cst_71 = arith.constant dense<0.000000e+00> : vector<8x64xf32>
    %79 = tpu.matmul %76, %77, %cst_71 {dimension_numbers = #tpu.dot_dimension_numbers<[1], [0], [0], [1], [0, 0, 1, 1], [], []>} : vector<8x128xf32>, vector<128x64xf32>, vector<8x64xf32> -> vector<8x64xf32>
    %80 = vector.broadcast %78 : vector<1x64xf32> to vector<8x64xf32>
    %81 = arith.addf %79, %80 : vector<8x64xf32>
    %cst_72 = arith.constant 0.000000e+00 : f32
    %82 = vector.broadcast %cst_72 : f32 to vector<8x64xf32>
    %83 = arith.maximumf %81, %82 : vector<8x64xf32>
    %c0_73 = arith.constant 0 : index
    %c0_74 = arith.constant 0 : index
    %84 = vector.load %arg25[%c0_73, %c0_74] : memref<64x32xf32, #tpu.memory_space<vmem>>, vector<64x32xf32>
    %c0_75 = arith.constant 0 : index
    %c0_76 = arith.constant 0 : index
    %85 = vector.load %arg26[%c0_75, %c0_76] : memref<1x32xf32, #tpu.memory_space<vmem>>, vector<1x32xf32>
    %cst_77 = arith.constant dense<0.000000e+00> : vector<8x32xf32>
    %86 = tpu.matmul %83, %84, %cst_77 {dimension_numbers = #tpu.dot_dimension_numbers<[1], [0], [0], [1], [0, 0, 1, 1], [], []>} : vector<8x64xf32>, vector<64x32xf32>, vector<8x32xf32> -> vector<8x32xf32>
    %87 = vector.broadcast %85 : vector<1x32xf32> to vector<8x32xf32>
    %88 = arith.addf %86, %87 : vector<8x32xf32>
    %cst_78 = arith.constant 0.000000e+00 : f32
    %89 = vector.broadcast %cst_78 : f32 to vector<8x32xf32>
    %90 = arith.maximumf %88, %89 : vector<8x32xf32>
    %c0_79 = arith.constant 0 : index
    %c0_80 = arith.constant 0 : index
    %91 = vector.load %arg27[%c0_79, %c0_80] : memref<32x32xf32, #tpu.memory_space<vmem>>, vector<32x32xf32>
    %c0_81 = arith.constant 0 : index
    %c0_82 = arith.constant 0 : index
    %92 = vector.load %arg28[%c0_81, %c0_82] : memref<1x32xf32, #tpu.memory_space<vmem>>, vector<1x32xf32>
    %cst_83 = arith.constant dense<0.000000e+00> : vector<8x32xf32>
    %93 = tpu.matmul %90, %91, %cst_83 {dimension_numbers = #tpu.dot_dimension_numbers<[1], [0], [0], [1], [0, 0, 1, 1], [], []>} : vector<8x32xf32>, vector<32x32xf32>, vector<8x32xf32> -> vector<8x32xf32>
    %94 = vector.broadcast %92 : vector<1x32xf32> to vector<8x32xf32>
    %95 = arith.addf %93, %94 : vector<8x32xf32>
    %cst_84 = arith.constant 1.250000e-01 : f32
    %96 = vector.broadcast %cst_84 : f32 to vector<1x8xf32>
    %cst_85 = arith.constant dense<0.000000e+00> : vector<1x16xf32>
    %97 = tpu.matmul %96, %40, %cst_85 {dimension_numbers = #tpu.dot_dimension_numbers<[1], [0], [0], [1], [0, 0, 1, 1], [], []>} : vector<1x8xf32>, vector<8x16xf32>, vector<1x16xf32> -> vector<1x16xf32>
    %c0_86 = arith.constant 0 : index
    %c0_87 = arith.constant 0 : index
    %98 = vector.load %arg29[%c0_86, %c0_87] : memref<1x16xf32, #tpu.memory_space<vmem>>, vector<1x16xf32>
    tpu.vector_store %arg29[%c0_86, %c0_87], %97 {strides = array<i32>} : memref<1x16xf32, #tpu.memory_space<vmem>>, vector<1x16xf32>,
    %c0_88 = arith.constant 0 : index
    %c0_89 = arith.constant 0 : index
    %99 = vector.load %arg30[%c0_88, %c0_89] : memref<8x32xf32, #tpu.memory_space<vmem>>, vector<8x32xf32>
    tpu.vector_store %arg30[%c0_88, %c0_89], %95 {strides = array<i32>} : memref<8x32xf32, #tpu.memory_space<vmem>>, vector<8x32xf32>,
    return
  }
}

</mosaic_0001>

<llo_original>
// kernel: _lambda_.1
$region0: #{_lambda_.1}
  #allocation0 [shape = 'u32[]', space=smem, size = 0x4, offset = 0x4, fixed_abs, tag = 'smem constant byte address 0x4 - core index']
  #allocation1 [shape = 'u32[144,128]{1,0:T(1,128)}', space=vmem, size = 0x12000, scoped, tag = 'internal scratch']
  %s0 = inlined_call_operand.smem [shape: u32[31], index: -1, kind: input, shape index: {}]
  %s1 = sld [smem:[%s0]]
  %s2 = scalar_lea.smem %s0, 1
  %s3 = sld [smem:[%s2]]
  %s4 = scalar_lea.smem %s0, 2
  %s5 = sld [smem:[%s4]]
  %s6 = scalar_lea.smem %s0, 3
  %s7 = sld [smem:[%s6]]
  %s8 = scalar_lea.smem %s0, 4
  %s9 = sld [smem:[%s8]]
  %s10 = scalar_lea.smem %s0, 5
  %s11 = sld [smem:[%s10]]
  %s12 = scalar_lea.smem %s0, 6
  %s13 = sld [smem:[%s12]]
  %s14 = scalar_lea.smem %s0, 7
  %s15 = sld [smem:[%s14]]
  %s16 = scalar_lea.smem %s0, 8
  %s17 = sld [smem:[%s16]]
  %s18 = scalar_lea.smem %s0, 9
  %s19 = sld [smem:[%s18]]
  %s20 = scalar_lea.smem %s0, 10
  %s21 = sld [smem:[%s20]]
  %s22 = scalar_lea.smem %s0, 11
  %s23 = sld [smem:[%s22]]
  %s24 = scalar_lea.smem %s0, 12
  %s25 = sld [smem:[%s24]]
  %s26 = scalar_lea.smem %s0, 13
  %s27 = sld [smem:[%s26]]
  %s28 = scalar_lea.smem %s0, 14
  %s29 = sld [smem:[%s28]]
  %s30 = scalar_lea.smem %s0, 15
  %s31 = sld [smem:[%s30]]
  %s32 = scalar_lea.smem %s0, 16
  %s33 = sld [smem:[%s32]]
  %s34 = scalar_lea.smem %s0, 17
  %s35 = sld [smem:[%s34]]
  %s36 = scalar_lea.smem %s0, 18
  %s37 = sld [smem:[%s36]]
  %s38 = scalar_lea.smem %s0, 19
  %s39 = sld [smem:[%s38]]
  %s40 = scalar_lea.smem %s0, 20
  %s41 = sld [smem:[%s40]]
  %s42 = scalar_lea.smem %s0, 21
  %s43 = sld [smem:[%s42]]
  %s44 = scalar_lea.smem %s0, 22
  %s45 = sld [smem:[%s44]]
  %s46 = scalar_lea.smem %s0, 23
  %s47 = sld [smem:[%s46]]
  %s48 = scalar_lea.smem %s0, 24
  %s49 = sld [smem:[%s48]]
  %s50 = scalar_lea.smem %s0, 25
  %s51 = sld [smem:[%s50]]
  %s52 = scalar_lea.smem %s0, 26
  %s53 = sld [smem:[%s52]]
  %s54 = scalar_lea.smem %s0, 27
  %s55 = sld [smem:[%s54]]
  %s56 = scalar_lea.smem %s0, 28
  %s57 = sld [smem:[%s56]]
  %s58 = scalar_lea.smem %s0, 29
  %s59 = sld [smem:[%s58]]
  %s60 = scalar_lea.smem %s0, 30
  %s61 = sld [smem:[%s60]]
  %62 = xla_tuple %s59, %s61
  %s63 = sld [smem:[#allocation0]]
  $region186: #{_lambda_.1} parent=0
    _
  %s65 = ssub.s32 1, %s63
  %s66 = scalar_select 0, %s65, %s63
  $region1: #{_lambda_.1} parent=0
    #allocation2 [shape = 'u8[4096]{0}', space=vmem, size = 0x1000, scoped, tag = 'input window, operand 0, single buffered']
    #allocation3 [shape = 's32[1]{0}', space=sflag, size = 0x4, scoped, tag = 'scoped memory for _lambda_.1']
    #allocation4 [shape = 's32[1]{0}', space=sflag, size = 0x4, scoped, tag = 'scoped memory for _lambda_.1']
    #allocation5 [shape = 'u8[16384]{0}', space=vmem, size = 0x4000, scoped, tag = 'input window, operand 1, single buffered']
    #allocation6 [shape = 's32[1]{0}', space=sflag, size = 0x4, scoped, tag = 'scoped memory for _lambda_.1']
    #allocation7 [shape = 'u8[512]{0}', space=vmem, size = 0x400, scoped, tag = 'input window, operand 2, single buffered']
    #allocation8 [shape = 'u8[16384]{0}', space=vmem, size = 0x4000, scoped, tag = 'input window, operand 3, single buffered']
    #allocation9 [shape = 's32[1]{0}', space=sflag, size = 0x4, scoped, tag = 'scoped memory for _lambda_.1']
    #allocation10 [shape = 'u8[512]{0}', space=vmem, size = 0x400, scoped, tag = 'input window, operand 4, single buffered']
    #allocation11 [shape = 'u8[32768]{0}', space=vmem, size = 0x8000, scoped, tag = 'input window, operand 5, single buffered']
    #allocation12 [shape = 's32[1]{0}', space=sflag, size = 0x4, scoped, tag = 'scoped memory for _lambda_.1']
    #allocation13 [shape = 'u8[512]{0}', space=vmem, size = 0x400, scoped, tag = 'input window, operand 6, single buffered']
    #allocation14 [shape = 'u8[512]{0}', space=vmem, size = 0x400, scoped, tag = 'input window, operand 8, single buffered']
    #allocation15 [shape = 's32[1]{0}', space=sflag, size = 0x4, scoped, tag = 'scoped memory for _lambda_.1']
    #allocation16 [shape = 'u8[512]{0}', space=vmem, size = 0x400, scoped, tag = 'input window, operand 10, single buffered']
    #allocation17 [shape = 'u8[16384]{0}', space=vmem, size = 0x4000, scoped, tag = 'input window, operand 13, single buffered']
    #allocation18 [shape = 's32[1]{0}', space=sflag, size = 0x4, scoped, tag = 'scoped memory for _lambda_.1']
    #allocation19 [shape = 'u8[16384]{0}', space=vmem, size = 0x4000, scoped, tag = 'input window, operand 15, single buffered']
    #allocation20 [shape = 'u8[32768]{0}', space=vmem, size = 0x8000, scoped, tag = 'input window, operand 17, single buffered']
    #allocation21 [shape = 's32[1]{0}', space=sflag, size = 0x4, scoped, tag = 'scoped memory for _lambda_.1']
    #allocation22 [shape = 'u8[16384]{0}', space=vmem, size = 0x4000, scoped, tag = 'input window, operand 27, single buffered']
    #allocation23 [shape = 'u8[512]{0}', space=vmem, size = 0x400, scoped, tag = 'output window, operand 0, single buffered']
    #allocation24 [shape = 'u8[4096]{0}', space=vmem, size = 0x1000, scoped, tag = 'output window, operand 1, single buffered']
    #allocation25 [shape = 's32[1]{0}', space=sflag, size = 0x4, scoped, tag = 'scoped memory for _lambda_.1']
    %67 = vsyncpa [#allocation3], 0
    %68 = vsyncpa [#allocation6], 0
    %69 = vsyncpa [#allocation9], 0
    %70 = vsyncpa [#allocation12], 0
    %71 = vsyncpa [#allocation15], 0
    %72 = vsyncpa [#allocation18], 0
    %73 = vsyncpa [#allocation21], 0
    %74 = vsyncpa [#allocation4], 0
    %75 = vsyncpa [#allocation25], 0
    // Predicated region
    $region2: #{_lambda_.1} parent=1 // pred_check
      _
    $region3: #{_lambda_.1} parent=1 // pred_check_branch
      %77 = sbr.rel (0) target = $region5
    $region4: #{_lambda_.1} parent=1 // pred_region
      %s79 = ssub.s32 128, 128
      %80 = vsyncadd [#allocation3], %s79
      %s82 = sshll.u32 [#allocation2], 4
      %s83 = int_to_ptr.vmem [resolvable:$true] %s82
      %85 = dma.hbm_to_vmem [thread:$0]  %s1, 128, %s83, [#allocation3]
    $region5: #{_lambda_.1} parent=1 // pred_fallthru
      _
    // Predicated region
    $region6: #{_lambda_.1} parent=1 // pred_check
      _
    $region7: #{_lambda_.1} parent=1 // pred_check_branch
      %87 = sbr.rel (0) target = $region9
    $region8: #{_lambda_.1} parent=1 // pred_region
      %s89 = ssub.s32 512, 512
      %90 = vsyncadd [#allocation6], %s89
      %s91 = sshll.u32 [#allocation5], 4
      %s92 = int_to_ptr.vmem [resolvable:$true] %s91
      %97 = dma.hbm_to_vmem [thread:$0]  %s3, 512, %s92, [#allocation6], 128, 128, 8
    $region9: #{_lambda_.1} parent=1 // pred_fallthru
      _
    // Predicated region
    $region10: #{_lambda_.1} parent=1 // pred_check
      _
    $region11: #{_lambda_.1} parent=1 // pred_check_branch
      %99 = sbr.rel (0) target = $region13
    $region12: #{_lambda_.1} parent=1 // pred_region
      %s101 = ssub.s32 16, 16
      %102 = vsyncadd [#allocation6], %s101
      %s104 = sshll.u32 [#allocation7], 4
      %s105 = int_to_ptr.vmem [resolvable:$true] %s104
      %107 = dma.hbm_to_vmem [thread:$0]  %s5, 16, %s105, [#allocation6]
    $region13: #{_lambda_.1} parent=1 // pred_fallthru
      _
    // Predicated region
    $region14: #{_lambda_.1} parent=1 // pred_check
      _
    $region15: #{_lambda_.1} parent=1 // pred_check_branch
      %109 = sbr.rel (0) target = $region17
    $region16: #{_lambda_.1} parent=1 // pred_region
      %s111 = ssub.s32 512, 512
      %112 = vsyncadd [#allocation9], %s111
      %s113 = sshll.u32 [#allocation8], 4
      %s114 = int_to_ptr.vmem [resolvable:$true] %s113
      %119 = dma.hbm_to_vmem [thread:$0]  %s7, 512, %s114, [#allocation9], 128, 128, 8
    $region17: #{_lambda_.1} parent=1 // pred_fallthru
      _
    // Predicated region
    $region18: #{_lambda_.1} parent=1 // pred_check
      _
    $region19: #{_lambda_.1} parent=1 // pred_check_branch
      %121 = sbr.rel (0) target = $region21
    $region20: #{_lambda_.1} parent=1 // pred_region
      %s123 = ssub.s32 16, 16
      %124 = vsyncadd [#allocation9], %s123
      %s126 = sshll.u32 [#allocation10], 4
      %s127 = int_to_ptr.vmem [resolvable:$true] %s126
      %129 = dma.hbm_to_vmem [thread:$0]  %s9, 16, %s127, [#allocation9]
    $region21: #{_lambda_.1} parent=1 // pred_fallthru
      _
    // Predicated region
    $region22: #{_lambda_.1} parent=1 // pred_check
      _
    $region23: #{_lambda_.1} parent=1 // pred_check_branch
      %131 = sbr.rel (0) target = $region25
    $region24: #{_lambda_.1} parent=1 // pred_region
      %s133 = ssub.s32 1024, 1024
      %134 = vsyncadd [#allocation12], %s133
      %s135 = sshll.u32 [#allocation11], 4
      %s136 = int_to_ptr.vmem [resolvable:$true] %s135
      %141 = dma.hbm_to_vmem [thread:$0]  %s11, 1024, %s136, [#allocation12], 128, 128, 8
    $region25: #{_lambda_.1} parent=1 // pred_fallthru
      _
    // Predicated region
    $region26: #{_lambda_.1} parent=1 // pred_check
      _
    $region27: #{_lambda_.1} parent=1 // pred_check_branch
      %143 = sbr.rel (0) target = $region29
    $region28: #{_lambda_.1} parent=1 // pred_region
      %s145 = ssub.s32 16, 16
      %146 = vsyncadd [#allocation12], %s145
      %s148 = sshll.u32 [#allocation13], 4
      %s149 = int_to_ptr.vmem [resolvable:$true] %s148
      %151 = dma.hbm_to_vmem [thread:$0]  %s13, 16, %s149, [#allocation12]
    $region29: #{_lambda_.1} parent=1 // pred_fallthru
      _
    // Predicated region
    $region30: #{_lambda_.1} parent=1 // pred_check
      _
    $region31: #{_lambda_.1} parent=1 // pred_check_branch
      %153 = sbr.rel (0) target = $region33
    $region32: #{_lambda_.1} parent=1 // pred_region
      _
    $region33: #{_lambda_.1} parent=1 // pred_fallthru
      _
    // Predicated region
    $region34: #{_lambda_.1} parent=1 // pred_check
      _
    $region35: #{_lambda_.1} parent=1 // pred_check_branch
      %155 = sbr.rel (0) target = $region37
    $region36: #{_lambda_.1} parent=1 // pred_region
      %s157 = ssub.s32 16, 16
      %158 = vsyncadd [#allocation15], %s157
      %s160 = sshll.u32 [#allocation14], 4
      %s161 = int_to_ptr.vmem [resolvable:$true] %s160
      %163 = dma.hbm_to_vmem [thread:$0]  %s17, 16, %s161, [#allocation15]
    $region37: #{_lambda_.1} parent=1 // pred_fallthru
      _
    // Predicated region
    $region38: #{_lambda_.1} parent=1 // pred_check
      _
    $region39: #{_lambda_.1} parent=1 // pred_check_branch
      %165 = sbr.rel (0) target = $region41
    $region40: #{_lambda_.1} parent=1 // pred_region
      _
    $region41: #{_lambda_.1} parent=1 // pred_fallthru
      _
    // Predicated region
    $region42: #{_lambda_.1} parent=1 // pred_check
      _
    $region43: #{_lambda_.1} parent=1 // pred_check_branch
      %167 = sbr.rel (0) target = $region45
    $region44: #{_lambda_.1} parent=1 // pred_region
      %s169 = ssub.s32 16, 16
      %170 = vsyncadd [#allocation15], %s169
      %s172 = sshll.u32 [#allocation16], 4
      %s173 = int_to_ptr.vmem [resolvable:$true] %s172
      %175 = dma.hbm_to_vmem [thread:$0]  %s21, 16, %s173, [#allocation15]
    $region45: #{_lambda_.1} parent=1 // pred_fallthru
      _
    // Predicated region
    $region46: #{_lambda_.1} parent=1 // pred_check
      _
    $region47: #{_lambda_.1} parent=1 // pred_check_branch
      %177 = sbr.rel (0) target = $region49
    $region48: #{_lambda_.1} parent=1 // pred_region
      _
    $region49: #{_lambda_.1} parent=1 // pred_fallthru
      _
    // Predicated region
    $region50: #{_lambda_.1} parent=1 // pred_check
      _
    $region51: #{_lambda_.1} parent=1 // pred_check_branch
      %179 = sbr.rel (0) target = $region53
    $region52: #{_lambda_.1} parent=1 // pred_region
      _
    $region53: #{_lambda_.1} parent=1 // pred_fallthru
      _
    // Predicated region
    $region54: #{_lambda_.1} parent=1 // pred_check
      _
    $region55: #{_lambda_.1} parent=1 // pred_check_branch
      %181 = sbr.rel (0) target = $region57
    $region56: #{_lambda_.1} parent=1 // pred_region
      %s183 = ssub.s32 512, 512
      %184 = vsyncadd [#allocation18], %s183
      %s185 = sshll.u32 [#allocation17], 4
      %s186 = int_to_ptr.vmem [resolvable:$true] %s185
      %191 = dma.hbm_to_vmem [thread:$0]  %s27, 512, %s186, [#allocation18], 128, 128, 8
    $region57: #{_lambda_.1} parent=1 // pred_fallthru
      _
    // Predicated region
    $region58: #{_lambda_.1} parent=1 // pred_check
      _
    $region59: #{_lambda_.1} parent=1 // pred_check_branch
      %193 = sbr.rel (0) target = $region61
    $region60: #{_lambda_.1} parent=1 // pred_region
      _
    $region61: #{_lambda_.1} parent=1 // pred_fallthru
      _
    // Predicated region
    $region62: #{_lambda_.1} parent=1 // pred_check
      _
    $region63: #{_lambda_.1} parent=1 // pred_check_branch
      %195 = sbr.rel (0) target = $region65
    $region64: #{_lambda_.1} parent=1 // pred_region
      %s197 = ssub.s32 512, 512
      %198 = vsyncadd [#allocation18], %s197
      %s199 = sshll.u32 [#allocation19], 4
      %s200 = int_to_ptr.vmem [resolvable:$true] %s199
      %205 = dma.hbm_to_vmem [thread:$0]  %s31, 512, %s200, [#allocation18], 128, 128, 8
    $region65: #{_lambda_.1} parent=1 // pred_fallthru
      _
    // Predicated region
    $region66: #{_lambda_.1} parent=1 // pred_check
      _
    $region67: #{_lambda_.1} parent=1 // pred_check_branch
      %207 = sbr.rel (0) target = $region69
    $region68: #{_lambda_.1} parent=1 // pred_region
      _
    $region69: #{_lambda_.1} parent=1 // pred_fallthru
      _
    // Predicated region
    $region70: #{_lambda_.1} parent=1 // pred_check
      _
    $region71: #{_lambda_.1} parent=1 // pred_check_branch
      %209 = sbr.rel (0) target = $region73
    $region72: #{_lambda_.1} parent=1 // pred_region
      %s211 = ssub.s32 1024, 1024
      %212 = vsyncadd [#allocation21], %s211
      %s213 = sshll.u32 [#allocation20], 4
      %s214 = int_to_ptr.vmem [resolvable:$true] %s213
      %219 = dma.hbm_to_vmem [thread:$0]  %s35, 1024, %s214, [#allocation21], 128, 128, 8
    $region73: #{_lambda_.1} parent=1 // pred_fallthru
      _
    // Predicated region
    $region74: #{_lambda_.1} parent=1 // pred_check
      _
    $region75: #{_lambda_.1} parent=1 // pred_check_branch
      %221 = sbr.rel (0) target = $region77
    $region76: #{_lambda_.1} parent=1 // pred_region
      _
    $region77: #{_lambda_.1} parent=1 // pred_fallthru
      _
    // Predicated region
    $region78: #{_lambda_.1} parent=1 // pred_check
      _
    $region79: #{_lambda_.1} parent=1 // pred_check_branch
      %223 = sbr.rel (0) target = $region81
    $region80: #{_lambda_.1} parent=1 // pred_region
      _
    $region81: #{_lambda_.1} parent=1 // pred_fallthru
      _
    // Predicated region
    $region82: #{_lambda_.1} parent=1 // pred_check
      _
    $region83: #{_lambda_.1} parent=1 // pred_check_branch
      %225 = sbr.rel (0) target = $region85
    $region84: #{_lambda_.1} parent=1 // pred_region
      _
    $region85: #{_lambda_.1} parent=1 // pred_fallthru
      _
    // Predicated region
    $region86: #{_lambda_.1} parent=1 // pred_check
      _
    $region87: #{_lambda_.1} parent=1 // pred_check_branch
      %227 = sbr.rel (0) target = $region89
    $region88: #{_lambda_.1} parent=1 // pred_region
      _
    $region89: #{_lambda_.1} parent=1 // pred_fallthru
      _
    // Predicated region
    $region90: #{_lambda_.1} parent=1 // pred_check
      _
    $region91: #{_lambda_.1} parent=1 // pred_check_branch
      %229 = sbr.rel (0) target = $region93
    $region92: #{_lambda_.1} parent=1 // pred_region
      _
    $region93: #{_lambda_.1} parent=1 // pred_fallthru
      _
    // Predicated region
    $region94: #{_lambda_.1} parent=1 // pred_check
      _
    $region95: #{_lambda_.1} parent=1 // pred_check_branch
      %231 = sbr.rel (0) target = $region97
    $region96: #{_lambda_.1} parent=1 // pred_region
      _
    $region97: #{_lambda_.1} parent=1 // pred_fallthru
      _
    // Predicated region
    $region98: #{_lambda_.1} parent=1 // pred_check
      _
    $region99: #{_lambda_.1} parent=1 // pred_check_branch
      %233 = sbr.rel (0) target = $region101
    $region100: #{_lambda_.1} parent=1 // pred_region
      _
    $region101: #{_lambda_.1} parent=1 // pred_fallthru
      _
    // Predicated region
    $region102: #{_lambda_.1} parent=1 // pred_check
      _
    $region103: #{_lambda_.1} parent=1 // pred_check_branch
      %235 = sbr.rel (0) target = $region105
    $region104: #{_lambda_.1} parent=1 // pred_region
      _
    $region105: #{_lambda_.1} parent=1 // pred_fallthru
      _
    // Predicated region
    $region106: #{_lambda_.1} parent=1 // pred_check
      _
    $region107: #{_lambda_.1} parent=1 // pred_check_branch
      %237 = sbr.rel (0) target = $region109
    $region108: #{_lambda_.1} parent=1 // pred_region
      _
    $region109: #{_lambda_.1} parent=1 // pred_fallthru
      _
    // Predicated region
    $region110: #{_lambda_.1} parent=1 // pred_check
      _
    $region111: #{_lambda_.1} parent=1 // pred_check_branch
      %239 = sbr.rel (0) target = $region113
    $region112: #{_lambda_.1} parent=1 // pred_region
      %s241 = ssub.s32 512, 512
      %242 = vsyncadd [#allocation21], %s241
      %s243 = sshll.u32 [#allocation22], 4
      %s244 = int_to_ptr.vmem [resolvable:$true] %s243
      %249 = dma.hbm_to_vmem [thread:$0]  %s55, 512, %s244, [#allocation21], 128, 128, 8
    $region113: #{_lambda_.1} parent=1 // pred_fallthru
      _
    // Predicated region
    $region114: #{_lambda_.1} parent=1 // pred_check
      _
    $region115: #{_lambda_.1} parent=1 // pred_check_branch
      %251 = sbr.rel (0) target = $region117
    $region116: #{_lambda_.1} parent=1 // pred_region
      _
    $region117: #{_lambda_.1} parent=1 // pred_fallthru
      _
    // Predicated region
    $region118: #{_lambda_.1} parent=1 // pred_check
      _
    $region119: #{_lambda_.1} parent=1 // pred_check_branch
      %253 = sbr.rel (0) target = $region121
    $region120: #{_lambda_.1} parent=1 // pred_region
      %254 = dma.done [#allocation3], 128
    $region121: #{_lambda_.1} parent=1 // pred_fallthru
      _
    // Predicated region
    $region122: #{_lambda_.1} parent=1 // pred_check
      _
    $region123: #{_lambda_.1} parent=1 // pred_check_branch
      %256 = sbr.rel (0) target = $region125
    $region124: #{_lambda_.1} parent=1 // pred_region
      %257 = dma.done [#allocation6], 512
    $region125: #{_lambda_.1} parent=1 // pred_fallthru
      _
    // Predicated region
    $region126: #{_lambda_.1} parent=1 // pred_check
      _
    $region127: #{_lambda_.1} parent=1 // pred_check_branch
      %259 = sbr.rel (0) target = $region129
    $region128: #{_lambda_.1} parent=1 // pred_region
      %260 = dma.done [#allocation6], 16
    $region129: #{_lambda_.1} parent=1 // pred_fallthru
      _
    // Predicated region
    $region130: #{_lambda_.1} parent=1 // pred_check
      _
    $region131: #{_lambda_.1} parent=1 // pred_check_branch
      %262 = sbr.rel (0) target = $region133
    $region132: #{_lambda_.1} parent=1 // pred_region
      %263 = dma.done [#allocation9], 512
    $region133: #{_lambda_.1} parent=1 // pred_fallthru
      _
    // Predicated region
    $region134: #{_lambda_.1} parent=1 // pred_check
      _
    $region135: #{_lambda_.1} parent=1 // pred_check_branch
      %265 = sbr.rel (0) target = $region137
    $region136: #{_lambda_.1} parent=1 // pred_region
      %266 = dma.done [#allocation9], 16
    $region137: #{_lambda_.1} parent=1 // pred_fallthru
      _
    // Predicated region
    $region138: #{_lambda_.1} parent=1 // pred_check
      _
    $region139: #{_lambda_.1} parent=1 // pred_check_branch
      %268 = sbr.rel (0) target = $region141
    $region140: #{_lambda_.1} parent=1 // pred_region
      %269 = dma.done [#allocation12], 1024
    $region141: #{_lambda_.1} parent=1 // pred_fallthru
      _
    // Predicated region
    $region142: #{_lambda_.1} parent=1 // pred_check
      _
    $region143: #{_lambda_.1} parent=1 // pred_check_branch
      %271 = sbr.rel (0) target = $region145
    $region144: #{_lambda_.1} parent=1 // pred_region
      %272 = dma.done [#allocation12], 16
    $region145: #{_lambda_.1} parent=1 // pred_fallthru
      _
    // Predicated region
    $region146: #{_lambda_.1} parent=1 // pred_check
      _
    $region147: #{_lambda_.1} parent=1 // pred_check_branch
      %274 = sbr.rel (0) target = $region149
    $region148: #{_lambda_.1} parent=1 // pred_region
      %275 = dma.done [#allocation15], 16
    $region149: #{_lambda_.1} parent=1 // pred_fallthru
      _
    // Predicated region
    $region150: #{_lambda_.1} parent=1 // pred_check
      _
    $region151: #{_lambda_.1} parent=1 // pred_check_branch
      %277 = sbr.rel (0) target = $region153
    $region152: #{_lambda_.1} parent=1 // pred_region
      %278 = dma.done [#allocation15], 16
    $region153: #{_lambda_.1} parent=1 // pred_fallthru
      _
    // Predicated region
    $region154: #{_lambda_.1} parent=1 // pred_check
      _
    $region155: #{_lambda_.1} parent=1 // pred_check_branch
      %280 = sbr.rel (0) target = $region157
    $region156: #{_lambda_.1} parent=1 // pred_region
      %281 = dma.done [#allocation18], 512
    $region157: #{_lambda_.1} parent=1 // pred_fallthru
      _
    // Predicated region
    $region158: #{_lambda_.1} parent=1 // pred_check
      _
    $region159: #{_lambda_.1} parent=1 // pred_check_branch
      %283 = sbr.rel (0) target = $region161
    $region160: #{_lambda_.1} parent=1 // pred_region
      %284 = dma.done [#allocation18], 512
    $region161: #{_lambda_.1} parent=1 // pred_fallthru
      _
    // Predicated region
    $region162: #{_lambda_.1} parent=1 // pred_check
      _
    $region163: #{_lambda_.1} parent=1 // pred_check_branch
      %286 = sbr.rel (0) target = $region165
    $region164: #{_lambda_.1} parent=1 // pred_region
      %287 = dma.done [#allocation21], 1024
    $region165: #{_lambda_.1} parent=1 // pred_fallthru
      _
    // Predicated region
    $region166: #{_lambda_.1} parent=1 // pred_check
      _
    $region167: #{_lambda_.1} parent=1 // pred_check_branch
      %289 = sbr.rel (0) target = $region169
    $region168: #{_lambda_.1} parent=1 // pred_region
      %290 = dma.done [#allocation21], 512
    $region169: #{_lambda_.1} parent=1 // pred_fallthru
      _
    %v291 = vld [vmem:[#allocation2] sm:$0xff]
    %v292 = vld [vmem:[#allocation5] sm:$0xff]
    %v293 = vld [vmem:[#allocation5 + $0x8] sm:$0xff]
    %v294 = vld [vmem:[#allocation5 + $0x10] sm:$0xff]
    %v295 = vld [vmem:[#allocation5 + $0x18] sm:$0xff]
    %v296 = vld [vmem:[#allocation7] sm:$0x1]
    %v298 = vlaneseq
    %v299 = vshrl.u32 %v298, 7
    %v300 = vsub.s32 0, %v299
    %v301 = vrot.slane %v296, %v300
    %vm303 = vcmask 261120
    %v305 = vsel %vm303, %v291, 0
    %307 = vmatprep.subr.mxu0 0.0
    %308 = vmatpush1.msra.mxu0 0.0
    %309 = vmatprep.subr.mxu0 0.0
    %310 = vmatpush1.msra.mxu0 0.0
    %311 = vmatprep.subr.mxu0 0.0
    %312 = vmatpush1.msra.mxu0 0.0
    %313 = vmatprep.subr.mxu0 0.0
    %314 = vmatpush1.msra.mxu0 0.0
    %315 = vmatprep.subr.mxu0 0.0
    %316 = vmatpush1.msra.mxu0 0.0
    %317 = vmatprep.subr.mxu0 0.0
    %318 = vmatpush1.msra.mxu0 0.0
    %319 = vmatprep.subr.mxu0 0.0
    %320 = vmatpush1.msra.mxu0 0.0
    %321 = vmatprep.subr.mxu0 0.0
    %322 = vmatpush1.msra.mxu0 0.0
    %323 = vmatprep.subr.mxu0 0.0
    %324 = vmatpush1.msra.mxu0 0.0
    %325 = vmatprep.subr.mxu0 0.0
    %326 = vmatpush1.msra.mxu0 0.0
    %327 = vmatprep.subr.mxu0 0.0
    %328 = vmatpush1.msra.mxu0 0.0
    %329 = vmatprep.subr.mxu0 0.0
    %330 = vmatpush1.msra.mxu0 0.0
    %331 = vmatprep.subr.mxu0 0.0
    %332 = vmatpush1.msra.mxu0 %v295
    %333 = vmatprep.subr.mxu0 0.0
    %334 = vmatpush1.msra.mxu0 %v294
    %335 = vmatprep.subr.mxu0 0.0
    %336 = vmatpush1.msra.mxu0 %v293
    %337 = vmatprep.subr.mxu0 0.0
    %338 = vmatpush1.msra.mxu0 %v292
    %339 = vmatprep.subr.mxu0 0.0
    %340 = vmatpush2.msra.mxu0 0.0
    %341 = vmatprep.subr.mxu0 0.0
    %342 = vmatpush2.msra.mxu0 0.0
    %343 = vmatprep.subr.mxu0 0.0
    %344 = vmatpush2.msra.mxu0 0.0
    %345 = vmatprep.subr.mxu0 0.0
    %346 = vmatpush2.msra.mxu0 0.0
    %347 = vmatprep.subr.mxu0 0.0
    %348 = vmatpush2.msra.mxu0 0.0
    %349 = vmatprep.subr.mxu0 0.0
    %350 = vmatpush2.msra.mxu0 0.0
    %351 = vmatprep.subr.mxu0 0.0
    %352 = vmatpush2.msra.mxu0 0.0
    %353 = vmatprep.subr.mxu0 0.0
    %354 = vmatpush2.msra.mxu0 0.0
    %355 = vmatprep.subr.mxu0 0.0
    %356 = vmatpush2.msra.mxu0 0.0
    %357 = vmatprep.subr.mxu0 0.0
    %358 = vmatpush2.msra.mxu0 0.0
    %359 = vmatprep.subr.mxu0 0.0
    %360 = vmatpush2.msra.mxu0 0.0
    %361 = vmatprep.subr.mxu0 0.0
    %362 = vmatpush2.msra.mxu0 0.0
    %363 = vmatprep.subr.mxu0 0.0
    %364 = vmatpush2.msra.mxu0 0.0
    %365 = vmatprep.subr.mxu0 0.0
    %366 = vmatpush2.msra.mxu0 0.0
    %367 = vmatprep.subr.mxu0 0.0
    %368 = vmatpush2.msra.mxu0 0.0
    %369 = vmatprep.subr.mxu0 0.0
    %370 = vmatpush2.msra.mxu0 0.0
    %371 = vmatprep.mubr.f32.mxu0 0.0
    %372 = vmatmul.mubr.f32.gmra.mxu0 %v305
    %v373 = vpop.f32.mrf.mxu0
    %v374 = vadd.f32 %v301, %v373
    %v375 = vpop.f32.mrf.mxu0
    %376 = vdwg.mxu0
    %v377 = vmax.f32 %v374, 0.0
    %v378 = vld [vmem:[#allocation8] sm:$0xff]
    %v379 = vld [vmem:[#allocation8 + $0x8] sm:$0xff]
    %v380 = vld [vmem:[#allocation8 + $0x10] sm:$0xff]
    %v381 = vld [vmem:[#allocation8 + $0x18] sm:$0xff]
    %v382 = vld [vmem:[#allocation10] sm:$0x1]
    %v384 = vlaneseq
    %v385 = vshrl.u32 %v384, 7
    %v386 = vsub.s32 0, %v385
    %v387 = vrot.slane %v382, %v386
    %v390 = vsel %vm303, %v377, 0
    %392 = vmatprep.subr.mxu0 0.0
    %393 = vmatpush1.msra.mxu0 0.0
    %394 = vmatprep.subr.mxu0 0.0
    %395 = vmatpush1.msra.mxu0 0.0
    %396 = vmatprep.subr.mxu0 0.0
    %397 = vmatpush1.msra.mxu0 0.0
    %398 = vmatprep.subr.mxu0 0.0
    %399 = vmatpush1.msra.mxu0 0.0
    %400 = vmatprep.subr.mxu0 0.0
    %401 = vmatpush1.msra.mxu0 0.0
    %402 = vmatprep.subr.mxu0 0.0
    %403 = vmatpush1.msra.mxu0 0.0
    %404 = vmatprep.subr.mxu0 0.0
    %405 = vmatpush1.msra.mxu0 0.0
    %406 = vmatprep.subr.mxu0 0.0
    %407 = vmatpush1.msra.mxu0 0.0
    %408 = vmatprep.subr.mxu0 0.0
    %409 = vmatpush1.msra.mxu0 0.0
    %410 = vmatprep.subr.mxu0 0.0
    %411 = vmatpush1.msra.mxu0 0.0
    %412 = vmatprep.subr.mxu0 0.0
    %413 = vmatpush1.msra.mxu0 0.0
    %414 = vmatprep.subr.mxu0 0.0
    %415 = vmatpush1.msra.mxu0 0.0
    %416 = vmatprep.subr.mxu0 0.0
    %417 = vmatpush1.msra.mxu0 %v381
    %418 = vmatprep.subr.mxu0 0.0
    %419 = vmatpush1.msra.mxu0 %v380
    %420 = vmatprep.subr.mxu0 0.0
    %421 = vmatpush1.msra.mxu0 %v379
    %422 = vmatprep.subr.mxu0 0.0
    %423 = vmatpush1.msra.mxu0 %v378
    %424 = vmatprep.subr.mxu0 0.0
    %425 = vmatpush2.msra.mxu0 0.0
    %426 = vmatprep.subr.mxu0 0.0
    %427 = vmatpush2.msra.mxu0 0.0
    %428 = vmatprep.subr.mxu0 0.0
    %429 = vmatpush2.msra.mxu0 0.0
    %430 = vmatprep.subr.mxu0 0.0
    %431 = vmatpush2.msra.mxu0 0.0
    %432 = vmatprep.subr.mxu0 0.0
    %433 = vmatpush2.msra.mxu0 0.0
    %434 = vmatprep.subr.mxu0 0.0
    %435 = vmatpush2.msra.mxu0 0.0
    %436 = vmatprep.subr.mxu0 0.0
    %437 = vmatpush2.msra.mxu0 0.0
    %438 = vmatprep.subr.mxu0 0.0
    %439 = vmatpush2.msra.mxu0 0.0
    %440 = vmatprep.subr.mxu0 0.0
    %441 = vmatpush2.msra.mxu0 0.0
    %442 = vmatprep.subr.mxu0 0.0
    %443 = vmatpush2.msra.mxu0 0.0
    %444 = vmatprep.subr.mxu0 0.0
    %445 = vmatpush2.msra.mxu0 0.0
    %446 = vmatprep.subr.mxu0 0.0
    %447 = vmatpush2.msra.mxu0 0.0
    %448 = vmatprep.subr.mxu0 0.0
    %449 = vmatpush2.msra.mxu0 0.0
    %450 = vmatprep.subr.mxu0 0.0
    %451 = vmatpush2.msra.mxu0 0.0
    %452 = vmatprep.subr.mxu0 0.0
    %453 = vmatpush2.msra.mxu0 0.0
    %454 = vmatprep.subr.mxu0 0.0
    %455 = vmatpush2.msra.mxu0 0.0
    %456 = vmatprep.mubr.f32.mxu0 0.0
    %457 = vmatmul.mubr.f32.gmra.mxu0 %v390
    %v458 = vpop.f32.mrf.mxu0
    %v459 = vadd.f32 %v387, %v458
    %v460 = vpop.f32.mrf.mxu0
    %461 = vdwg.mxu0
    %v462 = vmax.f32 %v459, 0.0
    %v463 = vld [vmem:[#allocation11] sm:$0xff]
    %v464 = vld [vmem:[#allocation11 + $0x8] sm:$0xff]
    %v465 = vld [vmem:[#allocation11 + $0x10] sm:$0xff]
    %v466 = vld [vmem:[#allocation11 + $0x18] sm:$0xff]
    %v467 = vld [vmem:[#allocation11 + $0x20] sm:$0xff]
    %v468 = vld [vmem:[#allocation11 + $0x28] sm:$0xff]
    %v469 = vld [vmem:[#allocation11 + $0x30] sm:$0xff]
    %v470 = vld [vmem:[#allocation11 + $0x38] sm:$0xff]
    %v471 = vld [vmem:[#allocation13] sm:$0x1]
    %v473 = vlaneseq
    %v474 = vshrl.u32 %v473, 7
    %v475 = vsub.s32 0, %v474
    %v476 = vrot.slane %v471, %v475
    %vm478 = vcmask 523264
    %v480 = vsel %vm478, %v462, 0
    %482 = vmatprep.subr.mxu0 0.0
    %483 = vmatpush1.msra.mxu0 0.0
    %484 = vmatprep.subr.mxu0 0.0
    %485 = vmatpush1.msra.mxu0 0.0
    %486 = vmatprep.subr.mxu0 0.0
    %487 = vmatpush1.msra.mxu0 0.0
    %488 = vmatprep.subr.mxu0 0.0
    %489 = vmatpush1.msra.mxu0 0.0
    %490 = vmatprep.subr.mxu0 0.0
    %491 = vmatpush1.msra.mxu0 0.0
    %492 = vmatprep.subr.mxu0 0.0
    %493 = vmatpush1.msra.mxu0 0.0
    %494 = vmatprep.subr.mxu0 0.0
    %495 = vmatpush1.msra.mxu0 0.0
    %496 = vmatprep.subr.mxu0 0.0
    %497 = vmatpush1.msra.mxu0 0.0
    %498 = vmatprep.subr.mxu0 0.0
    %499 = vmatpush1.msra.mxu0 %v470
    %500 = vmatprep.subr.mxu0 0.0
    %501 = vmatpush1.msra.mxu0 %v469
    %502 = vmatprep.subr.mxu0 0.0
    %503 = vmatpush1.msra.mxu0 %v468
    %504 = vmatprep.subr.mxu0 0.0
    %505 = vmatpush1.msra.mxu0 %v467
    %506 = vmatprep.subr.mxu0 0.0
    %507 = vmatpush1.msra.mxu0 %v466
    %508 = vmatprep.subr.mxu0 0.0
    %509 = vmatpush1.msra.mxu0 %v465
    %510 = vmatprep.subr.mxu0 0.0
    %511 = vmatpush1.msra.mxu0 %v464
    %512 = vmatprep.subr.mxu0 0.0
    %513 = vmatpush1.msra.mxu0 %v463
    %514 = vmatprep.subr.mxu0 0.0
    %515 = vmatpush2.msra.mxu0 0.0
    %516 = vmatprep.subr.mxu0 0.0
    %517 = vmatpush2.msra.mxu0 0.0
    %518 = vmatprep.subr.mxu0 0.0
    %519 = vmatpush2.msra.mxu0 0.0
    %520 = vmatprep.subr.mxu0 0.0
    %521 = vmatpush2.msra.mxu0 0.0
    %522 = vmatprep.subr.mxu0 0.0
    %523 = vmatpush2.msra.mxu0 0.0
    %524 = vmatprep.subr.mxu0 0.0
    %525 = vmatpush2.msra.mxu0 0.0
    %526 = vmatprep.subr.mxu0 0.0
    %527 = vmatpush2.msra.mxu0 0.0
    %528 = vmatprep.subr.mxu0 0.0
    %529 = vmatpush2.msra.mxu0 0.0
    %530 = vmatprep.subr.mxu0 0.0
    %531 = vmatpush2.msra.mxu0 0.0
    %532 = vmatprep.subr.mxu0 0.0
    %533 = vmatpush2.msra.mxu0 0.0
    %534 = vmatprep.subr.mxu0 0.0
    %535 = vmatpush2.msra.mxu0 0.0
    %536 = vmatprep.subr.mxu0 0.0
    %537 = vmatpush2.msra.mxu0 0.0
    %538 = vmatprep.subr.mxu0 0.0
    %539 = vmatpush2.msra.mxu0 0.0
    %540 = vmatprep.subr.mxu0 0.0
    %541 = vmatpush2.msra.mxu0 0.0
    %542 = vmatprep.subr.mxu0 0.0
    %543 = vmatpush2.msra.mxu0 0.0
    %544 = vmatprep.subr.mxu0 0.0
    %545 = vmatpush2.msra.mxu0 0.0
    %546 = vmatprep.mubr.f32.mxu0 0.0
    %547 = vmatmul.mubr.f32.gmra.mxu0 %v480
    %v548 = vpop.f32.mrf.mxu0
    %v549 = vadd.f32 %v476, %v548
    %v550 = vpop.f32.mrf.mxu0
    %551 = vdwg.mxu0
    %v552 = vmax.f32 %v549, 0.0
    %v553 = vld [vmem:[%s15] sm:$0xff]
    %v554 = vld [vmem:[%s15 + $0x8] sm:$0xff]
    %v555 = vld [vmem:[%s15 + $0x10] sm:$0xff]
    %v556 = vld [vmem:[%s15 + $0x18] sm:$0xff]
    %v557 = vld [vmem:[%s15 + $0x20] sm:$0xff]
    %v558 = vld [vmem:[%s15 + $0x28] sm:$0xff]
    %v559 = vld [vmem:[%s15 + $0x30] sm:$0xff]
    %v560 = vld [vmem:[%s15 + $0x38] sm:$0xff]
    %v561 = vld [vmem:[%s15 + $0x40] sm:$0xff]
    %v562 = vld [vmem:[%s15 + $0x48] sm:$0xff]
    %v563 = vld [vmem:[%s15 + $0x50] sm:$0xff]
    %v564 = vld [vmem:[%s15 + $0x58] sm:$0xff]
    %v565 = vld [vmem:[%s15 + $0x60] sm:$0xff]
    %v566 = vld [vmem:[%s15 + $0x68] sm:$0xff]
    %v567 = vld [vmem:[%s15 + $0x70] sm:$0xff]
    %v568 = vld [vmem:[%s15 + $0x78] sm:$0xff]
    %v569 = vld [vmem:[#allocation14] sm:$0x1]
    %v571 = vlaneseq
    %v572 = vshrl.u32 %v571, 7
    %v573 = vsub.s32 0, %v572
    %v574 = vrot.slane %v569, %v573
    %576 = vmatprep.subr.mxu0 0.0
    %577 = vmatpush1.msra.mxu0 %v568
    %578 = vmatprep.subr.mxu0 0.0
    %579 = vmatpush1.msra.mxu0 %v567
    %580 = vmatprep.subr.mxu0 0.0
    %581 = vmatpush1.msra.mxu0 %v566
    %582 = vmatprep.subr.mxu0 0.0
    %583 = vmatpush1.msra.mxu0 %v565
    %584 = vmatprep.subr.mxu0 0.0
    %585 = vmatpush1.msra.mxu0 %v564
    %586 = vmatprep.subr.mxu0 0.0
    %587 = vmatpush1.msra.mxu0 %v563
    %588 = vmatprep.subr.mxu0 0.0
    %589 = vmatpush1.msra.mxu0 %v562
    %590 = vmatprep.subr.mxu0 0.0
    %591 = vmatpush1.msra.mxu0 %v561
    %592 = vmatprep.subr.mxu0 0.0
    %593 = vmatpush1.msra.mxu0 %v560
    %594 = vmatprep.subr.mxu0 0.0
    %595 = vmatpush1.msra.mxu0 %v559
    %596 = vmatprep.subr.mxu0 0.0
    %597 = vmatpush1.msra.mxu0 %v558
    %598 = vmatprep.subr.mxu0 0.0
    %599 = vmatpush1.msra.mxu0 %v557
    %600 = vmatprep.subr.mxu0 0.0
    %601 = vmatpush1.msra.mxu0 %v556
    %602 = vmatprep.subr.mxu0 0.0
    %603 = vmatpush1.msra.mxu0 %v555
    %604 = vmatprep.subr.mxu0 0.0
    %605 = vmatpush1.msra.mxu0 %v554
    %606 = vmatprep.subr.mxu0 0.0
    %607 = vmatpush1.msra.mxu0 %v553
    %608 = vmatprep.subr.mxu0 0.0
    %609 = vmatpush2.msra.mxu0 0.0
    %610 = vmatprep.subr.mxu0 0.0
    %611 = vmatpush2.msra.mxu0 0.0
    %612 = vmatprep.subr.mxu0 0.0
    %613 = vmatpush2.msra.mxu0 0.0
    %614 = vmatprep.subr.mxu0 0.0
    %615 = vmatpush2.msra.mxu0 0.0
    %616 = vmatprep.subr.mxu0 0.0
    %617 = vmatpush2.msra.mxu0 0.0
    %618 = vmatprep.subr.mxu0 0.0
    %619 = vmatpush2.msra.mxu0 0.0
    %620 = vmatprep.subr.mxu0 0.0
    %621 = vmatpush2.msra.mxu0 0.0
    %622 = vmatprep.subr.mxu0 0.0
    %623 = vmatpush2.msra.mxu0 0.0
    %624 = vmatprep.subr.mxu0 0.0
    %625 = vmatpush2.msra.mxu0 0.0
    %626 = vmatprep.subr.mxu0 0.0
    %627 = vmatpush2.msra.mxu0 0.0
    %628 = vmatprep.subr.mxu0 0.0
    %629 = vmatpush2.msra.mxu0 0.0
    %630 = vmatprep.subr.mxu0 0.0
    %631 = vmatpush2.msra.mxu0 0.0
    %632 = vmatprep.subr.mxu0 0.0
    %633 = vmatpush2.msra.mxu0 0.0
    %634 = vmatprep.subr.mxu0 0.0
    %635 = vmatpush2.msra.mxu0 0.0
    %636 = vmatprep.subr.mxu0 0.0
    %637 = vmatpush2.msra.mxu0 0.0
    %638 = vmatprep.subr.mxu0 0.0
    %639 = vmatpush2.msra.mxu0 0.0
    %640 = vmatprep.mubr.f32.mxu0 0.0
    %641 = vmatmul.mubr.f32.gmra.mxu0 %v552
    %v642 = vpop.f32.mrf.mxu0
    %v643 = vadd.f32 %v574, %v642
    %v644 = vpop.f32.mrf.mxu0
    %645 = vdwg.mxu0
    %v646 = vmax.f32 %v643, 0.0
    %v647 = vld [vmem:[%s19] sm:$0xff]
    %v648 = vld [vmem:[%s19 + $0x8] sm:$0xff]
    %v649 = vld [vmem:[%s19 + $0x10] sm:$0xff]
    %v650 = vld [vmem:[%s19 + $0x18] sm:$0xff]
    %v651 = vld [vmem:[%s19 + $0x20] sm:$0xff]
    %v652 = vld [vmem:[%s19 + $0x28] sm:$0xff]
    %v653 = vld [vmem:[%s19 + $0x30] sm:$0xff]
    %v654 = vld [vmem:[%s19 + $0x38] sm:$0xff]
    %v655 = vld [vmem:[#allocation16] sm:$0x1]
    %v657 = vlaneseq
    %v658 = vshrl.u32 %v657, 7
    %v659 = vsub.s32 0, %v658
    %v660 = vrot.slane %v655, %v659
    %v663 = vsel %vm478, %v646, 0
    %665 = vmatprep.subr.mxu0 0.0
    %666 = vmatpush1.msra.mxu0 0.0
    %667 = vmatprep.subr.mxu0 0.0
    %668 = vmatpush1.msra.mxu0 0.0
    %669 = vmatprep.subr.mxu0 0.0
    %670 = vmatpush1.msra.mxu0 0.0
    %671 = vmatprep.subr.mxu0 0.0
    %672 = vmatpush1.msra.mxu0 0.0
    %673 = vmatprep.subr.mxu0 0.0
    %674 = vmatpush1.msra.mxu0 0.0
    %675 = vmatprep.subr.mxu0 0.0
    %676 = vmatpush1.msra.mxu0 0.0
    %677 = vmatprep.subr.mxu0 0.0
    %678 = vmatpush1.msra.mxu0 0.0
    %679 = vmatprep.subr.mxu0 0.0
    %680 = vmatpush1.msra.mxu0 0.0
    %681 = vmatprep.subr.mxu0 0.0
    %682 = vmatpush1.msra.mxu0 %v654
    %683 = vmatprep.subr.mxu0 0.0
    %684 = vmatpush1.msra.mxu0 %v653
    %685 = vmatprep.subr.mxu0 0.0
    %686 = vmatpush1.msra.mxu0 %v652
    %687 = vmatprep.subr.mxu0 0.0
    %688 = vmatpush1.msra.mxu0 %v651
    %689 = vmatprep.subr.mxu0 0.0
    %690 = vmatpush1.msra.mxu0 %v650
    %691 = vmatprep.subr.mxu0 0.0
    %692 = vmatpush1.msra.mxu0 %v649
    %693 = vmatprep.subr.mxu0 0.0
    %694 = vmatpush1.msra.mxu0 %v648
    %695 = vmatprep.subr.mxu0 0.0
    %696 = vmatpush1.msra.mxu0 %v647
    %697 = vmatprep.subr.mxu0 0.0
    %698 = vmatpush2.msra.mxu0 0.0
    %699 = vmatprep.subr.mxu0 0.0
    %700 = vmatpush2.msra.mxu0 0.0
    %701 = vmatprep.subr.mxu0 0.0
    %702 = vmatpush2.msra.mxu0 0.0
    %703 = vmatprep.subr.mxu0 0.0
    %704 = vmatpush2.msra.mxu0 0.0
    %705 = vmatprep.subr.mxu0 0.0
    %706 = vmatpush2.msra.mxu0 0.0
    %707 = vmatprep.subr.mxu0 0.0
    %708 = vmatpush2.msra.mxu0 0.0
    %709 = vmatprep.subr.mxu0 0.0
    %710 = vmatpush2.msra.mxu0 0.0
    %711 = vmatprep.subr.mxu0 0.0
    %712 = vmatpush2.msra.mxu0 0.0
    %713 = vmatprep.subr.mxu0 0.0
    %714 = vmatpush2.msra.mxu0 0.0
    %715 = vmatprep.subr.mxu0 0.0
    %716 = vmatpush2.msra.mxu0 0.0
    %717 = vmatprep.subr.mxu0 0.0
    %718 = vmatpush2.msra.mxu0 0.0
    %719 = vmatprep.subr.mxu0 0.0
    %720 = vmatpush2.msra.mxu0 0.0
    %721 = vmatprep.subr.mxu0 0.0
    %722 = vmatpush2.msra.mxu0 0.0
    %723 = vmatprep.subr.mxu0 0.0
    %724 = vmatpush2.msra.mxu0 0.0
    %725 = vmatprep.subr.mxu0 0.0
    %726 = vmatpush2.msra.mxu0 0.0
    %727 = vmatprep.subr.mxu0 0.0
    %728 = vmatpush2.msra.mxu0 0.0
    %729 = vmatprep.mubr.f32.mxu0 0.0
    %730 = vmatmul.mubr.f32.gmra.mxu0 %v663
    %v731 = vpop.f32.mrf.mxu0
    %v732 = vadd.f32 %v660, %v731
    %v733 = vpop.f32.mrf.mxu0
    %734 = vdwg.mxu0
    %v735 = vmax.f32 %v732, 0.0
    %v736 = vld [vmem:[%s23] sm:$0xff]
    %v737 = vld [vmem:[%s23 + $0x8] sm:$0xff]
    %v738 = vld [vmem:[%s23 + $0x10] sm:$0xff]
    %v739 = vld [vmem:[%s23 + $0x18] sm:$0xff]
    %v740 = vld [vmem:[%s25] sm:$0x1]
    %v742 = vlaneseq
    %v743 = vshrl.u32 %v742, 7
    %v744 = vsub.s32 0, %v743
    %v745 = vrot.slane %v740, %v744
    %v748 = vsel %vm303, %v735, 0
    %750 = vmatprep.subr.mxu0 0.0
    %751 = vmatpush1.msra.mxu0 0.0
    %752 = vmatprep.subr.mxu0 0.0
    %753 = vmatpush1.msra.mxu0 0.0
    %754 = vmatprep.subr.mxu0 0.0
    %755 = vmatpush1.msra.mxu0 0.0
    %756 = vmatprep.subr.mxu0 0.0
    %757 = vmatpush1.msra.mxu0 0.0
    %758 = vmatprep.subr.mxu0 0.0
    %759 = vmatpush1.msra.mxu0 0.0
    %760 = vmatprep.subr.mxu0 0.0
    %761 = vmatpush1.msra.mxu0 0.0
    %762 = vmatprep.subr.mxu0 0.0
    %763 = vmatpush1.msra.mxu0 0.0
    %764 = vmatprep.subr.mxu0 0.0
    %765 = vmatpush1.msra.mxu0 0.0
    %766 = vmatprep.subr.mxu0 0.0
    %767 = vmatpush1.msra.mxu0 0.0
    %768 = vmatprep.subr.mxu0 0.0
    %769 = vmatpush1.msra.mxu0 0.0
    %770 = vmatprep.subr.mxu0 0.0
    %771 = vmatpush1.msra.mxu0 0.0
    %772 = vmatprep.subr.mxu0 0.0
    %773 = vmatpush1.msra.mxu0 0.0
    %774 = vmatprep.subr.mxu0 0.0
    %775 = vmatpush1.msra.mxu0 %v739
    %776 = vmatprep.subr.mxu0 0.0
    %777 = vmatpush1.msra.mxu0 %v738
    %778 = vmatprep.subr.mxu0 0.0
    %779 = vmatpush1.msra.mxu0 %v737
    %780 = vmatprep.subr.mxu0 0.0
    %781 = vmatpush1.msra.mxu0 %v736
    %782 = vmatprep.subr.mxu0 0.0
    %783 = vmatpush2.msra.mxu0 0.0
    %784 = vmatprep.subr.mxu0 0.0
    %785 = vmatpush2.msra.mxu0 0.0
    %786 = vmatprep.subr.mxu0 0.0
    %787 = vmatpush2.msra.mxu0 0.0
    %788 = vmatprep.subr.mxu0 0.0
    %789 = vmatpush2.msra.mxu0 0.0
    %790 = vmatprep.subr.mxu0 0.0
    %791 = vmatpush2.msra.mxu0 0.0
    %792 = vmatprep.subr.mxu0 0.0
    %793 = vmatpush2.msra.mxu0 0.0
    %794 = vmatprep.subr.mxu0 0.0
    %795 = vmatpush2.msra.mxu0 0.0
    %796 = vmatprep.subr.mxu0 0.0
    %797 = vmatpush2.msra.mxu0 0.0
    %798 = vmatprep.subr.mxu0 0.0
    %799 = vmatpush2.msra.mxu0 0.0
    %800 = vmatprep.subr.mxu0 0.0
    %801 = vmatpush2.msra.mxu0 0.0
    %802 = vmatprep.subr.mxu0 0.0
    %803 = vmatpush2.msra.mxu0 0.0
    %804 = vmatprep.subr.mxu0 0.0
    %805 = vmatpush2.msra.mxu0 0.0
    %806 = vmatprep.subr.mxu0 0.0
    %807 = vmatpush2.msra.mxu0 0.0
    %808 = vmatprep.subr.mxu0 0.0
    %809 = vmatpush2.msra.mxu0 0.0
    %810 = vmatprep.subr.mxu0 0.0
    %811 = vmatpush2.msra.mxu0 0.0
    %812 = vmatprep.subr.mxu0 0.0
    %813 = vmatpush2.msra.mxu0 0.0
    %814 = vmatprep.mubr.f32.mxu0 0.0
    %815 = vmatmul.mubr.f32.gmra.mxu0 %v748
    %v816 = vpop.f32.mrf.mxu0
    %v817 = vadd.f32 %v745, %v816
    %v818 = vpop.f32.mrf.mxu0
    %819 = vdwg.mxu0
    %v820 = vld [vmem:[#allocation17] sm:$0xff]
    %v821 = vld [vmem:[#allocation17 + $0x8] sm:$0xff]
    %v822 = vld [vmem:[#allocation17 + $0x10] sm:$0xff]
    %v823 = vld [vmem:[#allocation17 + $0x18] sm:$0xff]
    %v824 = vld [vmem:[%s29] sm:$0x1]
    %v826 = vlaneseq
    %v827 = vshrl.u32 %v826, 7
    %v828 = vsub.s32 0, %v827
    %v829 = vrot.slane %v824, %v828
    %831 = vmatprep.subr.mxu0 0.0
    %832 = vmatpush1.msra.mxu0 0.0
    %833 = vmatprep.subr.mxu0 0.0
    %834 = vmatpush1.msra.mxu0 0.0
    %835 = vmatprep.subr.mxu0 0.0
    %836 = vmatpush1.msra.mxu0 0.0
    %837 = vmatprep.subr.mxu0 0.0
    %838 = vmatpush1.msra.mxu0 0.0
    %839 = vmatprep.subr.mxu0 0.0
    %840 = vmatpush1.msra.mxu0 0.0
    %841 = vmatprep.subr.mxu0 0.0
    %842 = vmatpush1.msra.mxu0 0.0
    %843 = vmatprep.subr.mxu0 0.0
    %844 = vmatpush1.msra.mxu0 0.0
    %845 = vmatprep.subr.mxu0 0.0
    %846 = vmatpush1.msra.mxu0 0.0
    %847 = vmatprep.subr.mxu0 0.0
    %848 = vmatpush1.msra.mxu0 0.0
    %849 = vmatprep.subr.mxu0 0.0
    %850 = vmatpush1.msra.mxu0 0.0
    %851 = vmatprep.subr.mxu0 0.0
    %852 = vmatpush1.msra.mxu0 0.0
    %853 = vmatprep.subr.mxu0 0.0
    %854 = vmatpush1.msra.mxu0 0.0
    %855 = vmatprep.subr.mxu0 0.0
    %856 = vmatpush1.msra.mxu0 %v823
    %857 = vmatprep.subr.mxu0 0.0
    %858 = vmatpush1.msra.mxu0 %v822
    %859 = vmatprep.subr.mxu0 0.0
    %860 = vmatpush1.msra.mxu0 %v821
    %861 = vmatprep.subr.mxu0 0.0
    %862 = vmatpush1.msra.mxu0 %v820
    %863 = vmatprep.subr.mxu0 0.0
    %864 = vmatpush2.msra.mxu0 0.0
    %865 = vmatprep.subr.mxu0 0.0
    %866 = vmatpush2.msra.mxu0 0.0
    %867 = vmatprep.subr.mxu0 0.0
    %868 = vmatpush2.msra.mxu0 0.0
    %869 = vmatprep.subr.mxu0 0.0
    %870 = vmatpush2.msra.mxu0 0.0
    %871 = vmatprep.subr.mxu0 0.0
    %872 = vmatpush2.msra.mxu0 0.0
    %873 = vmatprep.subr.mxu0 0.0
    %874 = vmatpush2.msra.mxu0 0.0
    %875 = vmatprep.subr.mxu0 0.0
    %876 = vmatpush2.msra.mxu0 0.0
    %877 = vmatprep.subr.mxu0 0.0
    %878 = vmatpush2.msra.mxu0 0.0
    %879 = vmatprep.subr.mxu0 0.0
    %880 = vmatpush2.msra.mxu0 0.0
    %881 = vmatprep.subr.mxu0 0.0
    %882 = vmatpush2.msra.mxu0 0.0
    %883 = vmatprep.subr.mxu0 0.0
    %884 = vmatpush2.msra.mxu0 0.0
    %885 = vmatprep.subr.mxu0 0.0
    %886 = vmatpush2.msra.mxu0 0.0
    %887 = vmatprep.subr.mxu0 0.0
    %888 = vmatpush2.msra.mxu0 0.0
    %889 = vmatprep.subr.mxu0 0.0
    %890 = vmatpush2.msra.mxu0 0.0
    %891 = vmatprep.subr.mxu0 0.0
    %892 = vmatpush2.msra.mxu0 0.0
    %893 = vmatprep.subr.mxu0 0.0
    %894 = vmatpush2.msra.mxu0 0.0
    %895 = vmatprep.mubr.f32.mxu0 0.0
    %896 = vmatmul.mubr.f32.gmra.mxu0 %v305
    %v897 = vpop.f32.mrf.mxu0
    %v898 = vadd.f32 %v829, %v897
    %v899 = vpop.f32.mrf.mxu0
    %900 = vdwg.mxu0
    %v901 = vmax.f32 %v898, 0.0
    %v902 = vld [vmem:[#allocation19] sm:$0xff]
    %v903 = vld [vmem:[#allocation19 + $0x8] sm:$0xff]
    %v904 = vld [vmem:[#allocation19 + $0x10] sm:$0xff]
    %v905 = vld [vmem:[#allocation19 + $0x18] sm:$0xff]
    %v906 = vld [vmem:[%s33] sm:$0x1]
    %v908 = vlaneseq
    %v909 = vshrl.u32 %v908, 7
    %v910 = vsub.s32 0, %v909
    %v911 = vrot.slane %v906, %v910
    %v914 = vsel %vm303, %v901, 0
    %916 = vmatprep.subr.mxu0 0.0
    %917 = vmatpush1.msra.mxu0 0.0
    %918 = vmatprep.subr.mxu0 0.0
    %919 = vmatpush1.msra.mxu0 0.0
    %920 = vmatprep.subr.mxu0 0.0
    %921 = vmatpush1.msra.mxu0 0.0
    %922 = vmatprep.subr.mxu0 0.0
    %923 = vmatpush1.msra.mxu0 0.0
    %924 = vmatprep.subr.mxu0 0.0
    %925 = vmatpush1.msra.mxu0 0.0
    %926 = vmatprep.subr.mxu0 0.0
    %927 = vmatpush1.msra.mxu0 0.0
    %928 = vmatprep.subr.mxu0 0.0
    %929 = vmatpush1.msra.mxu0 0.0
    %930 = vmatprep.subr.mxu0 0.0
    %931 = vmatpush1.msra.mxu0 0.0
    %932 = vmatprep.subr.mxu0 0.0
    %933 = vmatpush1.msra.mxu0 0.0
    %934 = vmatprep.subr.mxu0 0.0
    %935 = vmatpush1.msra.mxu0 0.0
    %936 = vmatprep.subr.mxu0 0.0
    %937 = vmatpush1.msra.mxu0 0.0
    %938 = vmatprep.subr.mxu0 0.0
    %939 = vmatpush1.msra.mxu0 0.0
    %940 = vmatprep.subr.mxu0 0.0
    %941 = vmatpush1.msra.mxu0 %v905
    %942 = vmatprep.subr.mxu0 0.0
    %943 = vmatpush1.msra.mxu0 %v904
    %944 = vmatprep.subr.mxu0 0.0
    %945 = vmatpush1.msra.mxu0 %v903
    %946 = vmatprep.subr.mxu0 0.0
    %947 = vmatpush1.msra.mxu0 %v902
    %948 = vmatprep.subr.mxu0 0.0
    %949 = vmatpush2.msra.mxu0 0.0
    %950 = vmatprep.subr.mxu0 0.0
    %951 = vmatpush2.msra.mxu0 0.0
    %952 = vmatprep.subr.mxu0 0.0
    %953 = vmatpush2.msra.mxu0 0.0
    %954 = vmatprep.subr.mxu0 0.0
    %955 = vmatpush2.msra.mxu0 0.0
    %956 = vmatprep.subr.mxu0 0.0
    %957 = vmatpush2.msra.mxu0 0.0
    %958 = vmatprep.subr.mxu0 0.0
    %959 = vmatpush2.msra.mxu0 0.0
    %960 = vmatprep.subr.mxu0 0.0
    %961 = vmatpush2.msra.mxu0 0.0
    %962 = vmatprep.subr.mxu0 0.0
    %963 = vmatpush2.msra.mxu0 0.0
    %964 = vmatprep.subr.mxu0 0.0
    %965 = vmatpush2.msra.mxu0 0.0
    %966 = vmatprep.subr.mxu0 0.0
    %967 = vmatpush2.msra.mxu0 0.0
    %968 = vmatprep.subr.mxu0 0.0
    %969 = vmatpush2.msra.mxu0 0.0
    %970 = vmatprep.subr.mxu0 0.0
    %971 = vmatpush2.msra.mxu0 0.0
    %972 = vmatprep.subr.mxu0 0.0
    %973 = vmatpush2.msra.mxu0 0.0
    %974 = vmatprep.subr.mxu0 0.0
    %975 = vmatpush2.msra.mxu0 0.0
    %976 = vmatprep.subr.mxu0 0.0
    %977 = vmatpush2.msra.mxu0 0.0
    %978 = vmatprep.subr.mxu0 0.0
    %979 = vmatpush2.msra.mxu0 0.0
    %980 = vmatprep.mubr.f32.mxu0 0.0
    %981 = vmatmul.mubr.f32.gmra.mxu0 %v914
    %v982 = vpop.f32.mrf.mxu0
    %v983 = vadd.f32 %v911, %v982
    %v984 = vpop.f32.mrf.mxu0
    %985 = vdwg.mxu0
    %v986 = vmax.f32 %v983, 0.0
    %v987 = vld [vmem:[#allocation20] sm:$0xff]
    %v988 = vld [vmem:[#allocation20 + $0x8] sm:$0xff]
    %v989 = vld [vmem:[#allocation20 + $0x10] sm:$0xff]
    %v990 = vld [vmem:[#allocation20 + $0x18] sm:$0xff]
    %v991 = vld [vmem:[#allocation20 + $0x20] sm:$0xff]
    %v992 = vld [vmem:[#allocation20 + $0x28] sm:$0xff]
    %v993 = vld [vmem:[#allocation20 + $0x30] sm:$0xff]
    %v994 = vld [vmem:[#allocation20 + $0x38] sm:$0xff]
    %v995 = vld [vmem:[%s37] sm:$0x1]
    %v997 = vlaneseq
    %v998 = vshrl.u32 %v997, 7
    %v999 = vsub.s32 0, %v998
    %v1000 = vrot.slane %v995, %v999
    %v1003 = vsel %vm478, %v986, 0
    %1005 = vmatprep.subr.mxu0 0.0
    %1006 = vmatpush1.msra.mxu0 0.0
    %1007 = vmatprep.subr.mxu0 0.0
    %1008 = vmatpush1.msra.mxu0 0.0
    %1009 = vmatprep.subr.mxu0 0.0
    %1010 = vmatpush1.msra.mxu0 0.0
    %1011 = vmatprep.subr.mxu0 0.0
    %1012 = vmatpush1.msra.mxu0 0.0
    %1013 = vmatprep.subr.mxu0 0.0
    %1014 = vmatpush1.msra.mxu0 0.0
    %1015 = vmatprep.subr.mxu0 0.0
    %1016 = vmatpush1.msra.mxu0 0.0
    %1017 = vmatprep.subr.mxu0 0.0
    %1018 = vmatpush1.msra.mxu0 0.0
    %1019 = vmatprep.subr.mxu0 0.0
    %1020 = vmatpush1.msra.mxu0 0.0
    %1021 = vmatprep.subr.mxu0 0.0
    %1022 = vmatpush1.msra.mxu0 %v994
    %1023 = vmatprep.subr.mxu0 0.0
    %1024 = vmatpush1.msra.mxu0 %v993
    %1025 = vmatprep.subr.mxu0 0.0
    %1026 = vmatpush1.msra.mxu0 %v992
    %1027 = vmatprep.subr.mxu0 0.0
    %1028 = vmatpush1.msra.mxu0 %v991
    %1029 = vmatprep.subr.mxu0 0.0
    %1030 = vmatpush1.msra.mxu0 %v990
    %1031 = vmatprep.subr.mxu0 0.0
    %1032 = vmatpush1.msra.mxu0 %v989
    %1033 = vmatprep.subr.mxu0 0.0
    %1034 = vmatpush1.msra.mxu0 %v988
    %1035 = vmatprep.subr.mxu0 0.0
    %1036 = vmatpush1.msra.mxu0 %v987
    %1037 = vmatprep.subr.mxu0 0.0
    %1038 = vmatpush2.msra.mxu0 0.0
    %1039 = vmatprep.subr.mxu0 0.0
    %1040 = vmatpush2.msra.mxu0 0.0
    %1041 = vmatprep.subr.mxu0 0.0
    %1042 = vmatpush2.msra.mxu0 0.0
    %1043 = vmatprep.subr.mxu0 0.0
    %1044 = vmatpush2.msra.mxu0 0.0
    %1045 = vmatprep.subr.mxu0 0.0
    %1046 = vmatpush2.msra.mxu0 0.0
    %1047 = vmatprep.subr.mxu0 0.0
    %1048 = vmatpush2.msra.mxu0 0.0
    %1049 = vmatprep.subr.mxu0 0.0
    %1050 = vmatpush2.msra.mxu0 0.0
    %1051 = vmatprep.subr.mxu0 0.0
    %1052 = vmatpush2.msra.mxu0 0.0
    %1053 = vmatprep.subr.mxu0 0.0
    %1054 = vmatpush2.msra.mxu0 0.0
    %1055 = vmatprep.subr.mxu0 0.0
    %1056 = vmatpush2.msra.mxu0 0.0
    %1057 = vmatprep.subr.mxu0 0.0
    %1058 = vmatpush2.msra.mxu0 0.0
    %1059 = vmatprep.subr.mxu0 0.0
    %1060 = vmatpush2.msra.mxu0 0.0
    %1061 = vmatprep.subr.mxu0 0.0
    %1062 = vmatpush2.msra.mxu0 0.0
    %1063 = vmatprep.subr.mxu0 0.0
    %1064 = vmatpush2.msra.mxu0 0.0
    %1065 = vmatprep.subr.mxu0 0.0
    %1066 = vmatpush2.msra.mxu0 0.0
    %1067 = vmatprep.subr.mxu0 0.0
    %1068 = vmatpush2.msra.mxu0 0.0
    %1069 = vmatprep.mubr.f32.mxu0 0.0
    %1070 = vmatmul.mubr.f32.gmra.mxu0 %v1003
    %v1071 = vpop.f32.mrf.mxu0
    %v1072 = vadd.f32 %v1000, %v1071
    %v1073 = vpop.f32.mrf.mxu0
    %1074 = vdwg.mxu0
    %v1075 = vmax.f32 %v1072, 0.0
    %v1076 = vld [vmem:[%s39] sm:$0xff]
    %v1077 = vld [vmem:[%s39 + $0x8] sm:$0xff]
    %v1078 = vld [vmem:[%s39 + $0x10] sm:$0xff]
    %v1079 = vld [vmem:[%s39 + $0x18] sm:$0xff]
    %v1080 = vld [vmem:[%s39 + $0x20] sm:$0xff]
    %v1081 = vld [vmem:[%s39 + $0x28] sm:$0xff]
    %v1082 = vld [vmem:[%s39 + $0x30] sm:$0xff]
    %v1083 = vld [vmem:[%s39 + $0x38] sm:$0xff]
    %v1084 = vld [vmem:[%s39 + $0x40] sm:$0xff]
    %v1085 = vld [vmem:[%s39 + $0x48] sm:$0xff]
    %v1086 = vld [vmem:[%s39 + $0x50] sm:$0xff]
    %v1087 = vld [vmem:[%s39 + $0x58] sm:$0xff]
    %v1088 = vld [vmem:[%s39 + $0x60] sm:$0xff]
    %v1089 = vld [vmem:[%s39 + $0x68] sm:$0xff]
    %v1090 = vld [vmem:[%s39 + $0x70] sm:$0xff]
    %v1091 = vld [vmem:[%s39 + $0x78] sm:$0xff]
    %v1092 = vld [vmem:[%s39 + $0x80] sm:$0xff]
    %v1093 = vld [vmem:[%s39 + $0x88] sm:$0xff]
    %v1094 = vld [vmem:[%s39 + $0x90] sm:$0xff]
    %v1095 = vld [vmem:[%s39 + $0x98] sm:$0xff]
    %v1096 = vld [vmem:[%s39 + $0xa0] sm:$0xff]
    %v1097 = vld [vmem:[%s39 + $0xa8] sm:$0xff]
    %v1098 = vld [vmem:[%s39 + $0xb0] sm:$0xff]
    %v1099 = vld [vmem:[%s39 + $0xb8] sm:$0xff]
    %v1100 = vld [vmem:[%s39 + $0xc0] sm:$0xff]
    %v1101 = vld [vmem:[%s39 + $0xc8] sm:$0xff]
    %v1102 = vld [vmem:[%s39 + $0xd0] sm:$0xff]
    %v1103 = vld [vmem:[%s39 + $0xd8] sm:$0xff]
    %v1104 = vld [vmem:[%s39 + $0xe0] sm:$0xff]
    %v1105 = vld [vmem:[%s39 + $0xe8] sm:$0xff]
    %v1106 = vld [vmem:[%s39 + $0xf0] sm:$0xff]
    %v1107 = vld [vmem:[%s39 + $0xf8] sm:$0xff]
    %v1108 = vld [vmem:[%s41] sm:$0x3]
    %v1110 = vlaneseq
    %v1111 = vshrl.u32 %v1110, 7
    %v1112 = vsub.s32 0, %v1111
    %v1113 = vrot.slane %v1108, %v1112
    %v1114 = vlaneseq
    %v1115 = vshrl.u32 %v1114, 7
    %v1116 = vsub.s32 1, %v1115
    %v1117 = vrot.slane %v1108, %v1116
    %1120 = vmatprep.subr.mxu0 %v1107
    %1121 = vmatpush1.msra.mxu0 %v1106
    %1122 = vmatprep.subr.mxu0 %v1105
    %1123 = vmatpush1.msra.mxu0 %v1104
    %1124 = vmatprep.subr.mxu0 %v1103
    %1125 = vmatpush1.msra.mxu0 %v1102
    %1126 = vmatprep.subr.mxu0 %v1101
    %1127 = vmatpush1.msra.mxu0 %v1100
    %1128 = vmatprep.subr.mxu0 %v1099
    %1129 = vmatpush1.msra.mxu0 %v1098
    %1130 = vmatprep.subr.mxu0 %v1097
    %1131 = vmatpush1.msra.mxu0 %v1096
    %1132 = vmatprep.subr.mxu0 %v1095
    %1133 = vmatpush1.msra.mxu0 %v1094
    %1134 = vmatprep.subr.mxu0 %v1093
    %1135 = vmatpush1.msra.mxu0 %v1092
    %1136 = vmatprep.subr.mxu0 %v1091
    %1137 = vmatpush1.msra.mxu0 %v1090
    %1138 = vmatprep.subr.mxu0 %v1089
    %1139 = vmatpush1.msra.mxu0 %v1088
    %1140 = vmatprep.subr.mxu0 %v1087
    %1141 = vmatpush1.msra.mxu0 %v1086
    %1142 = vmatprep.subr.mxu0 %v1085
    %1143 = vmatpush1.msra.mxu0 %v1084
    %1144 = vmatprep.subr.mxu0 %v1083
    %1145 = vmatpush1.msra.mxu0 %v1082
    %1146 = vmatprep.subr.mxu0 %v1081
    %1147 = vmatpush1.msra.mxu0 %v1080
    %1148 = vmatprep.subr.mxu0 %v1079
    %1149 = vmatpush1.msra.mxu0 %v1078
    %1150 = vmatprep.subr.mxu0 %v1077
    %1151 = vmatpush1.msra.mxu0 %v1076
    %1152 = vmatprep.subr.mxu0 0.0
    %1153 = vmatpush2.msra.mxu0 0.0
    %1154 = vmatprep.subr.mxu0 0.0
    %1155 = vmatpush2.msra.mxu0 0.0
    %1156 = vmatprep.subr.mxu0 0.0
    %1157 = vmatpush2.msra.mxu0 0.0
    %1158 = vmatprep.subr.mxu0 0.0
    %1159 = vmatpush2.msra.mxu0 0.0
    %1160 = vmatprep.subr.mxu0 0.0
    %1161 = vmatpush2.msra.mxu0 0.0
    %1162 = vmatprep.subr.mxu0 0.0
    %1163 = vmatpush2.msra.mxu0 0.0
    %1164 = vmatprep.subr.mxu0 0.0
    %1165 = vmatpush2.msra.mxu0 0.0
    %1166 = vmatprep.subr.mxu0 0.0
    %1167 = vmatpush2.msra.mxu0 0.0
    %1168 = vmatprep.subr.mxu0 0.0
    %1169 = vmatpush2.msra.mxu0 0.0
    %1170 = vmatprep.subr.mxu0 0.0
    %1171 = vmatpush2.msra.mxu0 0.0
    %1172 = vmatprep.subr.mxu0 0.0
    %1173 = vmatpush2.msra.mxu0 0.0
    %1174 = vmatprep.subr.mxu0 0.0
    %1175 = vmatpush2.msra.mxu0 0.0
    %1176 = vmatprep.subr.mxu0 0.0
    %1177 = vmatpush2.msra.mxu0 0.0
    %1178 = vmatprep.subr.mxu0 0.0
    %1179 = vmatpush2.msra.mxu0 0.0
    %1180 = vmatprep.subr.mxu0 0.0
    %1181 = vmatpush2.msra.mxu0 0.0
    %1182 = vmatprep.subr.mxu0 0.0
    %1183 = vmatpush2.msra.mxu0 0.0
    %1184 = vmatprep.mubr.f32.mxu0 0.0
    %1185 = vmatmul.mubr.f32.gmra.mxu0 %v1075
    %v1186 = vpop.f32.mrf.mxu0
    %v1187 = vadd.f32 %v1113, %v1186
    %v1188 = vpop.f32.mrf.mxu0
    %v1189 = vadd.f32 %v1117, %v1188
    %1190 = vdwg.mxu0
    %v1191 = vmax.f32 %v1187, 0.0
    %v1192 = vmax.f32 %v1189, 0.0
    %v1193 = vld [vmem:[%s43] sm:$0xff]
    %v1194 = vld [vmem:[%s43 + $0x8] sm:$0xff]
    %v1195 = vld [vmem:[%s43 + $0x10] sm:$0xff]
    %v1196 = vld [vmem:[%s43 + $0x18] sm:$0xff]
    %v1197 = vld [vmem:[%s43 + $0x20] sm:$0xff]
    %v1198 = vld [vmem:[%s43 + $0x28] sm:$0xff]
    %v1199 = vld [vmem:[%s43 + $0x30] sm:$0xff]
    %v1200 = vld [vmem:[%s43 + $0x38] sm:$0xff]
    %v1201 = vld [vmem:[%s43 + $0x40] sm:$0xff]
    %v1202 = vld [vmem:[%s43 + $0x48] sm:$0xff]
    %v1203 = vld [vmem:[%s43 + $0x50] sm:$0xff]
    %v1204 = vld [vmem:[%s43 + $0x58] sm:$0xff]
    %v1205 = vld [vmem:[%s43 + $0x60] sm:$0xff]
    %v1206 = vld [vmem:[%s43 + $0x68] sm:$0xff]
    %v1207 = vld [vmem:[%s43 + $0x70] sm:$0xff]
    %v1208 = vld [vmem:[%s43 + $0x78] sm:$0xff]
    %v1209 = vld [vmem:[%s43 + $0x80] sm:$0xff]
    %v1210 = vld [vmem:[%s43 + $0x88] sm:$0xff]
    %v1211 = vld [vmem:[%s43 + $0x90] sm:$0xff]
    %v1212 = vld [vmem:[%s43 + $0x98] sm:$0xff]
    %v1213 = vld [vmem:[%s43 + $0xa0] sm:$0xff]
    %v1214 = vld [vmem:[%s43 + $0xa8] sm:$0xff]
    %v1215 = vld [vmem:[%s43 + $0xb0] sm:$0xff]
    %v1216 = vld [vmem:[%s43 + $0xb8] sm:$0xff]
    %v1217 = vld [vmem:[%s43 + $0xc0] sm:$0xff]
    %v1218 = vld [vmem:[%s43 + $0xc8] sm:$0xff]
    %v1219 = vld [vmem:[%s43 + $0xd0] sm:$0xff]
    %v1220 = vld [vmem:[%s43 + $0xd8] sm:$0xff]
    %v1221 = vld [vmem:[%s43 + $0xe0] sm:$0xff]
    %v1222 = vld [vmem:[%s43 + $0xe8] sm:$0xff]
    %v1223 = vld [vmem:[%s43 + $0xf0] sm:$0xff]
    %v1224 = vld [vmem:[%s43 + $0xf8] sm:$0xff]
    %v1225 = vld [vmem:[%s45] sm:$0x1]
    %v1227 = vlaneseq
    %v1228 = vshrl.u32 %v1227, 7
    %v1229 = vsub.s32 0, %v1228
    %v1230 = vrot.slane %v1225, %v1229
    %1232 = vmatprep.subr.mxu0 0.0
    %1233 = vmatpush1.msra.mxu0 %v1208
    %1234 = vmatprep.subr.mxu0 0.0
    %1235 = vmatpush1.msra.mxu0 %v1207
    %1236 = vmatprep.subr.mxu0 0.0
    %1237 = vmatpush1.msra.mxu0 %v1206
    %1238 = vmatprep.subr.mxu0 0.0
    %1239 = vmatpush1.msra.mxu0 %v1205
    %1240 = vmatprep.subr.mxu0 0.0
    %1241 = vmatpush1.msra.mxu0 %v1204
    %1242 = vmatprep.subr.mxu0 0.0
    %1243 = vmatpush1.msra.mxu0 %v1203
    %1244 = vmatprep.subr.mxu0 0.0
    %1245 = vmatpush1.msra.mxu0 %v1202
    %1246 = vmatprep.subr.mxu0 0.0
    %1247 = vmatpush1.msra.mxu0 %v1201
    %1248 = vmatprep.subr.mxu0 0.0
    %1249 = vmatpush1.msra.mxu0 %v1200
    %1250 = vmatprep.subr.mxu0 0.0
    %1251 = vmatpush1.msra.mxu0 %v1199
    %1252 = vmatprep.subr.mxu0 0.0
    %1253 = vmatpush1.msra.mxu0 %v1198
    %1254 = vmatprep.subr.mxu0 0.0
    %1255 = vmatpush1.msra.mxu0 %v1197
    %1256 = vmatprep.subr.mxu0 0.0
    %1257 = vmatpush1.msra.mxu0 %v1196
    %1258 = vmatprep.subr.mxu0 0.0
    %1259 = vmatpush1.msra.mxu0 %v1195
    %1260 = vmatprep.subr.mxu0 0.0
    %1261 = vmatpush1.msra.mxu0 %v1194
    %1262 = vmatprep.subr.mxu0 0.0
    %1263 = vmatpush1.msra.mxu0 %v1193
    %1264 = vmatprep.subr.mxu0 0.0
    %1265 = vmatpush2.msra.mxu0 %v1224
    %1266 = vmatprep.subr.mxu0 0.0
    %1267 = vmatpush2.msra.mxu0 %v1223
    %1268 = vmatprep.subr.mxu0 0.0
    %1269 = vmatpush2.msra.mxu0 %v1222
    %1270 = vmatprep.subr.mxu0 0.0
    %1271 = vmatpush2.msra.mxu0 %v1221
    %1272 = vmatprep.subr.mxu0 0.0
    %1273 = vmatpush2.msra.mxu0 %v1220
    %1274 = vmatprep.subr.mxu0 0.0
    %1275 = vmatpush2.msra.mxu0 %v1219
    %1276 = vmatprep.subr.mxu0 0.0
    %1277 = vmatpush2.msra.mxu0 %v1218
    %1278 = vmatprep.subr.mxu0 0.0
    %1279 = vmatpush2.msra.mxu0 %v1217
    %1280 = vmatprep.subr.mxu0 0.0
    %1281 = vmatpush2.msra.mxu0 %v1216
    %1282 = vmatprep.subr.mxu0 0.0
    %1283 = vmatpush2.msra.mxu0 %v1215
    %1284 = vmatprep.subr.mxu0 0.0
    %1285 = vmatpush2.msra.mxu0 %v1214
    %1286 = vmatprep.subr.mxu0 0.0
    %1287 = vmatpush2.msra.mxu0 %v1213
    %1288 = vmatprep.subr.mxu0 0.0
    %1289 = vmatpush2.msra.mxu0 %v1212
    %1290 = vmatprep.subr.mxu0 0.0
    %1291 = vmatpush2.msra.mxu0 %v1211
    %1292 = vmatprep.subr.mxu0 0.0
    %1293 = vmatpush2.msra.mxu0 %v1210
    %1294 = vmatprep.subr.mxu0 0.0
    %1295 = vmatpush2.msra.mxu0 %v1209
    %1296 = vmatprep.mubr.f32.mxu0 %v1192
    %1297 = vmatmul.mubr.f32.gmra.mxu0 %v1191
    %v1298 = vpop.f32.mrf.mxu0
    %v1299 = vadd.f32 %v1230, %v1298
    %v1300 = vpop.f32.mrf.mxu0
    %1301 = vdwg.mxu0
    %v1302 = vmax.f32 %v1299, 0.0
    %v1303 = vld [vmem:[%s47] sm:$0xff]
    %v1304 = vld [vmem:[%s47 + $0x8] sm:$0xff]
    %v1305 = vld [vmem:[%s47 + $0x10] sm:$0xff]
    %v1306 = vld [vmem:[%s47 + $0x18] sm:$0xff]
    %v1307 = vld [vmem:[%s47 + $0x20] sm:$0xff]
    %v1308 = vld [vmem:[%s47 + $0x28] sm:$0xff]
    %v1309 = vld [vmem:[%s47 + $0x30] sm:$0xff]
    %v1310 = vld [vmem:[%s47 + $0x38] sm:$0xff]
    %v1311 = vld [vmem:[%s47 + $0x40] sm:$0xff]
    %v1312 = vld [vmem:[%s47 + $0x48] sm:$0xff]
    %v1313 = vld [vmem:[%s47 + $0x50] sm:$0xff]
    %v1314 = vld [vmem:[%s47 + $0x58] sm:$0xff]
    %v1315 = vld [vmem:[%s47 + $0x60] sm:$0xff]
    %v1316 = vld [vmem:[%s47 + $0x68] sm:$0xff]
    %v1317 = vld [vmem:[%s47 + $0x70] sm:$0xff]
    %v1318 = vld [vmem:[%s47 + $0x78] sm:$0xff]
    %v1319 = vld [vmem:[%s49] sm:$0x1]
    %v1321 = vlaneseq
    %v1322 = vshrl.u32 %v1321, 7
    %v1323 = vsub.s32 0, %v1322
    %v1324 = vrot.slane %v1319, %v1323
    %1326 = vmatprep.subr.mxu0 0.0
    %1327 = vmatpush1.msra.mxu0 %v1318
    %1328 = vmatprep.subr.mxu0 0.0
    %1329 = vmatpush1.msra.mxu0 %v1317
    %1330 = vmatprep.subr.mxu0 0.0
    %1331 = vmatpush1.msra.mxu0 %v1316
    %1332 = vmatprep.subr.mxu0 0.0
    %1333 = vmatpush1.msra.mxu0 %v1315
    %1334 = vmatprep.subr.mxu0 0.0
    %1335 = vmatpush1.msra.mxu0 %v1314
    %1336 = vmatprep.subr.mxu0 0.0
    %1337 = vmatpush1.msra.mxu0 %v1313
    %1338 = vmatprep.subr.mxu0 0.0
    %1339 = vmatpush1.msra.mxu0 %v1312
    %1340 = vmatprep.subr.mxu0 0.0
    %1341 = vmatpush1.msra.mxu0 %v1311
    %1342 = vmatprep.subr.mxu0 0.0
    %1343 = vmatpush1.msra.mxu0 %v1310
    %1344 = vmatprep.subr.mxu0 0.0
    %1345 = vmatpush1.msra.mxu0 %v1309
    %1346 = vmatprep.subr.mxu0 0.0
    %1347 = vmatpush1.msra.mxu0 %v1308
    %1348 = vmatprep.subr.mxu0 0.0
    %1349 = vmatpush1.msra.mxu0 %v1307
    %1350 = vmatprep.subr.mxu0 0.0
    %1351 = vmatpush1.msra.mxu0 %v1306
    %1352 = vmatprep.subr.mxu0 0.0
    %1353 = vmatpush1.msra.mxu0 %v1305
    %1354 = vmatprep.subr.mxu0 0.0
    %1355 = vmatpush1.msra.mxu0 %v1304
    %1356 = vmatprep.subr.mxu0 0.0
    %1357 = vmatpush1.msra.mxu0 %v1303
    %1358 = vmatprep.subr.mxu0 0.0
    %1359 = vmatpush2.msra.mxu0 0.0
    %1360 = vmatprep.subr.mxu0 0.0
    %1361 = vmatpush2.msra.mxu0 0.0
    %1362 = vmatprep.subr.mxu0 0.0
    %1363 = vmatpush2.msra.mxu0 0.0
    %1364 = vmatprep.subr.mxu0 0.0
    %1365 = vmatpush2.msra.mxu0 0.0
    %1366 = vmatprep.subr.mxu0 0.0
    %1367 = vmatpush2.msra.mxu0 0.0
    %1368 = vmatprep.subr.mxu0 0.0
    %1369 = vmatpush2.msra.mxu0 0.0
    %1370 = vmatprep.subr.mxu0 0.0
    %1371 = vmatpush2.msra.mxu0 0.0
    %1372 = vmatprep.subr.mxu0 0.0
    %1373 = vmatpush2.msra.mxu0 0.0
    %1374 = vmatprep.subr.mxu0 0.0
    %1375 = vmatpush2.msra.mxu0 0.0
    %1376 = vmatprep.subr.mxu0 0.0
    %1377 = vmatpush2.msra.mxu0 0.0
    %1378 = vmatprep.subr.mxu0 0.0
    %1379 = vmatpush2.msra.mxu0 0.0
    %1380 = vmatprep.subr.mxu0 0.0
    %1381 = vmatpush2.msra.mxu0 0.0
    %1382 = vmatprep.subr.mxu0 0.0
    %1383 = vmatpush2.msra.mxu0 0.0
    %1384 = vmatprep.subr.mxu0 0.0
    %1385 = vmatpush2.msra.mxu0 0.0
    %1386 = vmatprep.subr.mxu0 0.0
    %1387 = vmatpush2.msra.mxu0 0.0
    %1388 = vmatprep.subr.mxu0 0.0
    %1389 = vmatpush2.msra.mxu0 0.0
    %1390 = vmatprep.mubr.f32.mxu0 0.0
    %1391 = vmatmul.mubr.f32.gmra.mxu0 %v1302
    %v1392 = vpop.f32.mrf.mxu0
    %v1393 = vadd.f32 %v1324, %v1392
    %v1394 = vpop.f32.mrf.mxu0
    %1395 = vdwg.mxu0
    %v1396 = vmax.f32 %v1393, 0.0
    %v1397 = vld [vmem:[%s51] sm:$0xff]
    %v1398 = vld [vmem:[%s51 + $0x8] sm:$0xff]
    %v1399 = vld [vmem:[%s51 + $0x10] sm:$0xff]
    %v1400 = vld [vmem:[%s51 + $0x18] sm:$0xff]
    %v1401 = vld [vmem:[%s51 + $0x20] sm:$0xff]
    %v1402 = vld [vmem:[%s51 + $0x28] sm:$0xff]
    %v1403 = vld [vmem:[%s51 + $0x30] sm:$0xff]
    %v1404 = vld [vmem:[%s51 + $0x38] sm:$0xff]
    %v1405 = vld [vmem:[%s53] sm:$0x1]
    %v1407 = vlaneseq
    %v1408 = vshrl.u32 %v1407, 7
    %v1409 = vsub.s32 0, %v1408
    %v1410 = vrot.slane %v1405, %v1409
    %v1413 = vsel %vm478, %v1396, 0
    %1415 = vmatprep.subr.mxu0 0.0
    %1416 = vmatpush1.msra.mxu0 0.0
    %1417 = vmatprep.subr.mxu0 0.0
    %1418 = vmatpush1.msra.mxu0 0.0
    %1419 = vmatprep.subr.mxu0 0.0
    %1420 = vmatpush1.msra.mxu0 0.0
    %1421 = vmatprep.subr.mxu0 0.0
    %1422 = vmatpush1.msra.mxu0 0.0
    %1423 = vmatprep.subr.mxu0 0.0
    %1424 = vmatpush1.msra.mxu0 0.0
    %1425 = vmatprep.subr.mxu0 0.0
    %1426 = vmatpush1.msra.mxu0 0.0
    %1427 = vmatprep.subr.mxu0 0.0
    %1428 = vmatpush1.msra.mxu0 0.0
    %1429 = vmatprep.subr.mxu0 0.0
    %1430 = vmatpush1.msra.mxu0 0.0
    %1431 = vmatprep.subr.mxu0 0.0
    %1432 = vmatpush1.msra.mxu0 %v1404
    %1433 = vmatprep.subr.mxu0 0.0
    %1434 = vmatpush1.msra.mxu0 %v1403
    %1435 = vmatprep.subr.mxu0 0.0
    %1436 = vmatpush1.msra.mxu0 %v1402
    %1437 = vmatprep.subr.mxu0 0.0
    %1438 = vmatpush1.msra.mxu0 %v1401
    %1439 = vmatprep.subr.mxu0 0.0
    %1440 = vmatpush1.msra.mxu0 %v1400
    %1441 = vmatprep.subr.mxu0 0.0
    %1442 = vmatpush1.msra.mxu0 %v1399
    %1443 = vmatprep.subr.mxu0 0.0
    %1444 = vmatpush1.msra.mxu0 %v1398
    %1445 = vmatprep.subr.mxu0 0.0
    %1446 = vmatpush1.msra.mxu0 %v1397
    %1447 = vmatprep.subr.mxu0 0.0
    %1448 = vmatpush2.msra.mxu0 0.0
    %1449 = vmatprep.subr.mxu0 0.0
    %1450 = vmatpush2.msra.mxu0 0.0
    %1451 = vmatprep.subr.mxu0 0.0
    %1452 = vmatpush2.msra.mxu0 0.0
    %1453 = vmatprep.subr.mxu0 0.0
    %1454 = vmatpush2.msra.mxu0 0.0
    %1455 = vmatprep.subr.mxu0 0.0
    %1456 = vmatpush2.msra.mxu0 0.0
    %1457 = vmatprep.subr.mxu0 0.0
    %1458 = vmatpush2.msra.mxu0 0.0
    %1459 = vmatprep.subr.mxu0 0.0
    %1460 = vmatpush2.msra.mxu0 0.0
    %1461 = vmatprep.subr.mxu0 0.0
    %1462 = vmatpush2.msra.mxu0 0.0
    %1463 = vmatprep.subr.mxu0 0.0
    %1464 = vmatpush2.msra.mxu0 0.0
    %1465 = vmatprep.subr.mxu0 0.0
    %1466 = vmatpush2.msra.mxu0 0.0
    %1467 = vmatprep.subr.mxu0 0.0
    %1468 = vmatpush2.msra.mxu0 0.0
    %1469 = vmatprep.subr.mxu0 0.0
    %1470 = vmatpush2.msra.mxu0 0.0
    %1471 = vmatprep.subr.mxu0 0.0
    %1472 = vmatpush2.msra.mxu0 0.0
    %1473 = vmatprep.subr.mxu0 0.0
    %1474 = vmatpush2.msra.mxu0 0.0
    %1475 = vmatprep.subr.mxu0 0.0
    %1476 = vmatpush2.msra.mxu0 0.0
    %1477 = vmatprep.subr.mxu0 0.0
    %1478 = vmatpush2.msra.mxu0 0.0
    %1479 = vmatprep.mubr.f32.mxu0 0.0
    %1480 = vmatmul.mubr.f32.gmra.mxu0 %v1413
    %v1481 = vpop.f32.mrf.mxu0
    %v1482 = vadd.f32 %v1410, %v1481
    %v1483 = vpop.f32.mrf.mxu0
    %1484 = vdwg.mxu0
    %v1485 = vmax.f32 %v1482, 0.0
    %v1486 = vld [vmem:[#allocation22] sm:$0xff]
    %v1487 = vld [vmem:[#allocation22 + $0x8] sm:$0xff]
    %v1488 = vld [vmem:[#allocation22 + $0x10] sm:$0xff]
    %v1489 = vld [vmem:[#allocation22 + $0x18] sm:$0xff]
    %v1490 = vld [vmem:[%s57] sm:$0x1]
    %v1492 = vlaneseq
    %v1493 = vshrl.u32 %v1492, 7
    %v1494 = vsub.s32 0, %v1493
    %v1495 = vrot.slane %v1490, %v1494
    %v1498 = vsel %vm303, %v1485, 0
    %1500 = vmatprep.subr.mxu0 0.0
    %1501 = vmatpush1.msra.mxu0 0.0
    %1502 = vmatprep.subr.mxu0 0.0
    %1503 = vmatpush1.msra.mxu0 0.0
    %1504 = vmatprep.subr.mxu0 0.0
    %1505 = vmatpush1.msra.mxu0 0.0
    %1506 = vmatprep.subr.mxu0 0.0
    %1507 = vmatpush1.msra.mxu0 0.0
    %1508 = vmatprep.subr.mxu0 0.0
    %1509 = vmatpush1.msra.mxu0 0.0
    %1510 = vmatprep.subr.mxu0 0.0
    %1511 = vmatpush1.msra.mxu0 0.0
    %1512 = vmatprep.subr.mxu0 0.0
    %1513 = vmatpush1.msra.mxu0 0.0
    %1514 = vmatprep.subr.mxu0 0.0
    %1515 = vmatpush1.msra.mxu0 0.0
    %1516 = vmatprep.subr.mxu0 0.0
    %1517 = vmatpush1.msra.mxu0 0.0
    %1518 = vmatprep.subr.mxu0 0.0
    %1519 = vmatpush1.msra.mxu0 0.0
    %1520 = vmatprep.subr.mxu0 0.0
    %1521 = vmatpush1.msra.mxu0 0.0
    %1522 = vmatprep.subr.mxu0 0.0
    %1523 = vmatpush1.msra.mxu0 0.0
    %1524 = vmatprep.subr.mxu0 0.0
    %1525 = vmatpush1.msra.mxu0 %v1489
    %1526 = vmatprep.subr.mxu0 0.0
    %1527 = vmatpush1.msra.mxu0 %v1488
    %1528 = vmatprep.subr.mxu0 0.0
    %1529 = vmatpush1.msra.mxu0 %v1487
    %1530 = vmatprep.subr.mxu0 0.0
    %1531 = vmatpush1.msra.mxu0 %v1486
    %1532 = vmatprep.subr.mxu0 0.0
    %1533 = vmatpush2.msra.mxu0 0.0
    %1534 = vmatprep.subr.mxu0 0.0
    %1535 = vmatpush2.msra.mxu0 0.0
    %1536 = vmatprep.subr.mxu0 0.0
    %1537 = vmatpush2.msra.mxu0 0.0
    %1538 = vmatprep.subr.mxu0 0.0
    %1539 = vmatpush2.msra.mxu0 0.0
    %1540 = vmatprep.subr.mxu0 0.0
    %1541 = vmatpush2.msra.mxu0 0.0
    %1542 = vmatprep.subr.mxu0 0.0
    %1543 = vmatpush2.msra.mxu0 0.0
    %1544 = vmatprep.subr.mxu0 0.0
    %1545 = vmatpush2.msra.mxu0 0.0
    %1546 = vmatprep.subr.mxu0 0.0
    %1547 = vmatpush2.msra.mxu0 0.0
    %1548 = vmatprep.subr.mxu0 0.0
    %1549 = vmatpush2.msra.mxu0 0.0
    %1550 = vmatprep.subr.mxu0 0.0
    %1551 = vmatpush2.msra.mxu0 0.0
    %1552 = vmatprep.subr.mxu0 0.0
    %1553 = vmatpush2.msra.mxu0 0.0
    %1554 = vmatprep.subr.mxu0 0.0
    %1555 = vmatpush2.msra.mxu0 0.0
    %1556 = vmatprep.subr.mxu0 0.0
    %1557 = vmatpush2.msra.mxu0 0.0
    %1558 = vmatprep.subr.mxu0 0.0
    %1559 = vmatpush2.msra.mxu0 0.0
    %1560 = vmatprep.subr.mxu0 0.0
    %1561 = vmatpush2.msra.mxu0 0.0
    %1562 = vmatprep.subr.mxu0 0.0
    %1563 = vmatpush2.msra.mxu0 0.0
    %1564 = vmatprep.mubr.f32.mxu0 0.0
    %1565 = vmatmul.mubr.f32.gmra.mxu0 %v1498
    %v1566 = vpop.f32.mrf.mxu0
    %v1567 = vadd.f32 %v1495, %v1566
    %v1568 = vpop.f32.mrf.mxu0
    %1569 = vdwg.mxu0
    %vm1570 = vcmask 64512
    %v1572 = vsel %vm1570, 0.125, 0
    %1574 = vmatprep.subr.mxu0 0.0
    %1575 = vmatpush1.msra.mxu0 0.0
    %1576 = vmatprep.subr.mxu0 0.0
    %1577 = vmatpush1.msra.mxu0 0.0
    %1578 = vmatprep.subr.mxu0 0.0
    %1579 = vmatpush1.msra.mxu0 0.0
    %1580 = vmatprep.subr.mxu0 0.0
    %1581 = vmatpush1.msra.mxu0 0.0
    %1582 = vmatprep.subr.mxu0 0.0
    %1583 = vmatpush1.msra.mxu0 0.0
    %1584 = vmatprep.subr.mxu0 0.0
    %1585 = vmatpush1.msra.mxu0 0.0
    %1586 = vmatprep.subr.mxu0 0.0
    %1587 = vmatpush1.msra.mxu0 0.0
    %1588 = vmatprep.subr.mxu0 0.0
    %1589 = vmatpush1.msra.mxu0 0.0
    %1590 = vmatprep.subr.mxu0 0.0
    %1591 = vmatpush1.msra.mxu0 0.0
    %1592 = vmatprep.subr.mxu0 0.0
    %1593 = vmatpush1.msra.mxu0 0.0
    %1594 = vmatprep.subr.mxu0 0.0
    %1595 = vmatpush1.msra.mxu0 0.0
    %1596 = vmatprep.subr.mxu0 0.0
    %1597 = vmatpush1.msra.mxu0 0.0
    %1598 = vmatprep.subr.mxu0 0.0
    %1599 = vmatpush1.msra.mxu0 0.0
    %1600 = vmatprep.subr.mxu0 0.0
    %1601 = vmatpush1.msra.mxu0 0.0
    %1602 = vmatprep.subr.mxu0 0.0
    %1603 = vmatpush1.msra.mxu0 0.0
    %1604 = vmatprep.subr.mxu0 0.0
    %1605 = vmatpush1.msra.mxu0 %v817
    %1606 = vmatprep.subr.mxu0 0.0
    %1607 = vmatpush2.msra.mxu0 0.0
    %1608 = vmatprep.subr.mxu0 0.0
    %1609 = vmatpush2.msra.mxu0 0.0
    %1610 = vmatprep.subr.mxu0 0.0
    %1611 = vmatpush2.msra.mxu0 0.0
    %1612 = vmatprep.subr.mxu0 0.0
    %1613 = vmatpush2.msra.mxu0 0.0
    %1614 = vmatprep.subr.mxu0 0.0
    %1615 = vmatpush2.msra.mxu0 0.0
    %1616 = vmatprep.subr.mxu0 0.0
    %1617 = vmatpush2.msra.mxu0 0.0
    %1618 = vmatprep.subr.mxu0 0.0
    %1619 = vmatpush2.msra.mxu0 0.0
    %1620 = vmatprep.subr.mxu0 0.0
    %1621 = vmatpush2.msra.mxu0 0.0
    %1622 = vmatprep.subr.mxu0 0.0
    %1623 = vmatpush2.msra.mxu0 0.0
    %1624 = vmatprep.subr.mxu0 0.0
    %1625 = vmatpush2.msra.mxu0 0.0
    %1626 = vmatprep.subr.mxu0 0.0
    %1627 = vmatpush2.msra.mxu0 0.0
    %1628 = vmatprep.subr.mxu0 0.0
    %1629 = vmatpush2.msra.mxu0 0.0
    %1630 = vmatprep.subr.mxu0 0.0
    %1631 = vmatpush2.msra.mxu0 0.0
    %1632 = vmatprep.subr.mxu0 0.0
    %1633 = vmatpush2.msra.mxu0 0.0
    %1634 = vmatprep.subr.mxu0 0.0
    %1635 = vmatpush2.msra.mxu0 0.0
    %1636 = vmatprep.subr.mxu0 0.0
    %1637 = vmatpush2.msra.mxu0 0.0
    %1638 = vmatprep.mubr.f32.mxu0 0.0
    %1639 = vmatmul.mubr.f32.gmra.mxu0 %v1572
    %v1640 = vpop.f32.mrf.mxu0
    %v1641 = vadd.f32 0.0, %v1640
    %v1642 = vpop.f32.mrf.mxu0
    %1643 = vdwg.mxu0
    %vm1644 = vcmask 122880
    %1645 = vst.msk [vmem:[#allocation23] sm:$0x1] %vm1644, %v1641
    %1646 = vst.msk [vmem:[#allocation24] sm:$0xff] %vm303, %v1567
    // Predicated region
    $region170: #{_lambda_.1} parent=1 // pred_check
      _
    $region171: #{_lambda_.1} parent=1 // pred_check_branch
      %1648 = sbr.rel (0) target = $region173
    $region172: #{_lambda_.1} parent=1 // pred_region
      %s1650 = ssub.s32 16, 16
      %1651 = vsyncadd [#allocation4], %s1650
      %s1653 = sshll.u32 [#allocation23], 4
      %s1654 = int_to_ptr.vmem [resolvable:$true] %s1653
      %1656 = dma.vmem_to_hbm [thread:$0]  %s1654, 16, %s59, [#allocation4]
    $region173: #{_lambda_.1} parent=1 // pred_fallthru
      _
    // Predicated region
    $region174: #{_lambda_.1} parent=1 // pred_check
      _
    $region175: #{_lambda_.1} parent=1 // pred_check_branch
      %1658 = sbr.rel (0) target = $region177
    $region176: #{_lambda_.1} parent=1 // pred_region
      %s1660 = ssub.s32 128, 128
      %1661 = vsyncadd [#allocation25], %s1660
      %s1663 = sshll.u32 [#allocation24], 4
      %s1664 = int_to_ptr.vmem [resolvable:$true] %s1663
      %1666 = dma.vmem_to_hbm [thread:$0]  %s1664, 128, %s61, [#allocation25]
    $region177: #{_lambda_.1} parent=1 // pred_fallthru
      _
    // Predicated region
    $region178: #{_lambda_.1} parent=1 // pred_check
      _
    $region179: #{_lambda_.1} parent=1 // pred_check_branch
      %1668 = sbr.rel (0) target = $region181
    $region180: #{_lambda_.1} parent=1 // pred_region
      %1669 = dma.done [#allocation4], 16
    $region181: #{_lambda_.1} parent=1 // pred_fallthru
      _
    // Predicated region
    $region182: #{_lambda_.1} parent=1 // pred_check
      _
    $region183: #{_lambda_.1} parent=1 // pred_check_branch
      %1671 = sbr.rel (0) target = $region185
    $region184: #{_lambda_.1} parent=1 // pred_region
      %1672 = dma.done [#allocation25], 128
    $region185: #{_lambda_.1} parent=1 // pred_fallthru
      _
    %1673 = vsyncpa [#allocation3], 1
    %1674 = vsyncpa [#allocation6], 1
    %1675 = vsyncpa [#allocation9], 1
    %1676 = vsyncpa [#allocation12], 1
    %1677 = vsyncpa [#allocation15], 1
    %1678 = vsyncpa [#allocation18], 1
    %1679 = vsyncpa [#allocation21], 1
    %1680 = vsyncpa [#allocation4], 1
    %1681 = vsyncpa [#allocation25], 1

</llo_original>
